<compile_context>
chip_gen: v5e
topology: v5e:2x2
jax: 0.10.0
libtpu: 0.0.40
codegen_flags: <defaults>
</compile_context>

<pallas_src>
import jax
import jax.numpy as jnp
from jax.experimental import pallas as pl
from jax.experimental.pallas import tpu as pltpu


# ----------------------------- config (small) -------------------------------
BATCH = 2
SEQ = 8
HIDDEN = 32                      # logical hidden size of the toy encoder
NUM_HEADS = 4
HEAD_DIM = HIDDEN // NUM_HEADS
INTERMEDIATE = 64                # logical FFN width
NUM_LAYERS = 2
VOCAB = 64
LN_EPS = 1e-12

HIDDEN_PAD = 128                 # lane-dense padded hidden (zero-padded cols)
INTER_PAD = 128                  # lane-dense padded FFN width
ROWS = BATCH * SEQ               # flattened token rows


# ------------------------------- kernel --------------------------------------
def fused_encoder_kernel(
    emb_ref, maskb_ref, eg_ref, eb_ref,                     # layer-invariant
    wqkv_ref, bqkv_ref, wo_ref, bo_ref, g1_ref, b1_ref,     # per-layer (L squeezed)
    w1_ref, bb1_ref, w2_ref, bb2_ref, g2_ref, b2_ref,
    o_ref,                                                  # [ROWS, HIDDEN_PAD], resident
):
    layer = pl.program_id(0)
    bf16 = jnp.bfloat16
    f32 = jnp.float32

    # Column mask selecting the logical HIDDEN columns (hoisted, reused by LNs).
    col_mask = (jax.lax.broadcasted_iota(jnp.int32, (ROWS, HIDDEN_PAD), 1)
                < HIDDEN).astype(f32)
    inv_h = 1.0 / HIDDEN

    def layer_norm(x, gamma, beta):
        # x has zeros in padded columns; statistics over the true HIDDEN cols.
        mean = jnp.sum(x, axis=-1, keepdims=True) * inv_h
        xc = (x - mean) * col_mask
        var = jnp.sum(xc * xc, axis=-1, keepdims=True) * inv_h
        return xc * jax.lax.rsqrt(var + LN_EPS) * gamma + beta

    # Embedding LayerNorm, done once at layer 0 into the resident output block.
    @pl.when(layer == 0)
    def _():
        o_ref[...] = layer_norm(emb_ref[...], eg_ref[...], eb_ref[...])

    x = o_ref[...]                                           # [ROWS, H_PAD] f32

    # ---- fused QKV projection (bf16 MXU inputs, f32 accumulation) -----------
    qkv = jnp.dot(x.astype(bf16), wqkv_ref[...],
                  preferred_element_type=f32) + bqkv_ref[...]   # [ROWS, 3*H_PAD]

    bias = maskb_ref[...][:, None, :]                        # [B, 1, S] additive, f32
    scale = 1.0 / (HEAD_DIM ** 0.5)

    # ---- multi-head self-attention ------------------------------------------
    # Batched over batch via 3-D einsum; small static head loop accumulates the
    # output projection head-by-head (no concatenates, no explicit transposes).
    attn = jnp.zeros((ROWS, HIDDEN_PAD), f32)
    for h in range(NUM_HEADS):
        lo = h * HEAD_DIM
        hi = lo + HEAD_DIM
        qh = qkv[:, lo:hi].reshape(BATCH, SEQ, HEAD_DIM)
        kh = qkv[:, HIDDEN_PAD + lo:HIDDEN_PAD + hi].reshape(BATCH, SEQ, HEAD_DIM)
        vh = qkv[:, 2 * HIDDEN_PAD + lo:2 * HIDDEN_PAD + hi].reshape(BATCH, SEQ, HEAD_DIM)

        scores = jnp.einsum('bqd,bkd->bqk', qh.astype(bf16), kh.astype(bf16),
                            preferred_element_type=f32) * scale + bias  # f32
        m = jnp.max(scores, axis=-1, keepdims=True)
        e = jnp.exp(scores - m)
        p = e * pl.reciprocal(jnp.sum(e, axis=-1, keepdims=True), approx=True)

        ctx = jnp.einsum('bqk,bkd->bqd', p.astype(bf16), vh.astype(bf16),
                         preferred_element_type=f32)          # [B, S, hd]
        attn = attn + jnp.dot(ctx.reshape(ROWS, HEAD_DIM).astype(bf16),
                              wo_ref[lo:hi, :].astype(bf16),
                              preferred_element_type=f32)
    attn = attn + bo_ref[...]

    # ---- residual + LayerNorm, FFN, residual + LayerNorm ---------------------
    x1 = layer_norm(x + attn, g1_ref[...], b1_ref[...])

    h_mid = jnp.dot(x1.astype(bf16), w1_ref[...],
                    preferred_element_type=f32) + bb1_ref[...]
    # TODO(synk): HF BERT 'gelu' is the exact erf form; tanh approximation used
    # here (EUP-friendly), outputs differ slightly from AutoModel.
    h_mid = jax.nn.gelu(h_mid)
    ffn = jnp.dot(h_mid.astype(bf16), w2_ref[...],
                  preferred_element_type=f32) + bb2_ref[...]

    o_ref[...] = layer_norm(x1 + ffn, g2_ref[...], b2_ref[...])


# ------------------------------- wrapper --------------------------------------
def transformer_forward(params, input_ids, attention_mask):
    """Equivalent of `Transformer.forward(...)[0]` -> last_hidden_state [B,S,H]."""
    B, S = input_ids.shape

    # Embedding lookup (glue: gather stays in plain JAX), then pad to 128 lanes.
    emb = (params["word_emb"][input_ids]
           + params["pos_emb"][None, :S, :]
           + params["type_emb"][0][None, None, :])               # [B, S, H]
    emb_flat = emb.reshape(B * S, HIDDEN).astype(jnp.float32)
    emb_pad = jnp.pad(emb_flat, ((0, 0), (0, HIDDEN_PAD - HIDDEN)))

    # Additive attention-mask bias, HF style: (1 - mask) * -1e9  (kept in f32).
    mask_bias = (1.0 - attention_mask.astype(jnp.float32)) * -1e9  # [B, S]

    def inv_spec(shape):
        return pl.BlockSpec(shape, lambda l, _n=len(shape): (0,) * _n)

    def per_layer(d1, d2):
        return pl.BlockSpec((None, d1, d2), lambda l: (l, 0, 0))

    in_specs = [
        inv_spec((ROWS, HIDDEN_PAD)),              # emb
        inv_spec((B, S)),                          # mask bias
        inv_spec((1, HIDDEN_PAD)),                 # emb LN gamma
        inv_spec((1, HIDDEN_PAD)),                 # emb LN beta
        per_layer(HIDDEN_PAD, 3 * HIDDEN_PAD),     # Wqkv (bf16)
        per_layer(1, 3 * HIDDEN_PAD),              # bqkv
        per_layer(HIDDEN_PAD, HIDDEN_PAD),         # Wo (f32, row-sliced per head)
        per_layer(1, HIDDEN_PAD),                  # bo
        per_layer(1, HIDDEN_PAD),                  # LN1 gamma
        per_layer(1, HIDDEN_PAD),                  # LN1 beta
        per_layer(HIDDEN_PAD, INTER_PAD),          # W1 (bf16)
        per_layer(1, INTER_PAD),                   # b1
        per_layer(INTER_PAD, HIDDEN_PAD),          # W2 (bf16)
        per_layer(1, HIDDEN_PAD),                  # b2
        per_layer(1, HIDDEN_PAD),                  # LN2 gamma
        per_layer(1, HIDDEN_PAD),                  # LN2 beta
    ]
    out_spec = pl.BlockSpec((ROWS, HIDDEN_PAD), lambda l: (0, 0))

    out = pl.pallas_call(
        fused_encoder_kernel,
        out_shape=jax.ShapeDtypeStruct((ROWS, HIDDEN_PAD), jnp.float32),
        grid_spec=pltpu.PrefetchScalarGridSpec(
            num_scalar_prefetch=0,
            grid=(NUM_LAYERS,),
            in_specs=in_specs,
            out_specs=out_spec,
        ),
        compiler_params=pltpu.CompilerParams(
            dimension_semantics=("arbitrary",),    # layer axis is sequential
            vmem_limit_bytes=32 << 20,
        ),
    )(emb_pad, mask_bias,
      params["emb_ln_g"], params["emb_ln_b"],
      params["wqkv"], params["bqkv"], params["wo"], params["bo"],
      params["g1"], params["b1"], params["w1"], params["bb1"],
      params["w2"], params["bb2"], params["g2"], params["b2"])

    return out[:, :HIDDEN].reshape(B, S, HIDDEN)   # last_hidden_state


# ------------------------------ parameters ------------------------------------
def init_params(key):
    std = 0.02
    keys = iter(jax.random.split(key, 64))

    def w(shape):
        return (std * jax.random.normal(next(keys), shape)).astype(jnp.float32)

    def pad2(a, rows, cols):
        return jnp.pad(a, ((0, rows - a.shape[0]), (0, cols - a.shape[1])))

    def pad_row(v, cols):
        return jnp.pad(v, (0, cols - v.shape[0]))[None, :]     # [1, cols]

    stacks = {n: [] for n in
              ("wqkv", "bqkv", "wo", "bo", "g1", "b1",
               "w1", "bb1", "w2", "bb2", "g2", "b2")}
    for _ in range(NUM_LAYERS):
        wq = pad2(w((HIDDEN, HIDDEN)), HIDDEN_PAD, HIDDEN_PAD)
        wk = pad2(w((HIDDEN, HIDDEN)), HIDDEN_PAD, HIDDEN_PAD)
        wv = pad2(w((HIDDEN, HIDDEN)), HIDDEN_PAD, HIDDEN_PAD)
        stacks["wqkv"].append(
            jnp.concatenate([wq, wk, wv], axis=-1).astype(jnp.bfloat16))
        stacks["bqkv"].append(jnp.zeros((1, 3 * HIDDEN_PAD), jnp.float32))
        stacks["wo"].append(pad2(w((HIDDEN, HIDDEN)), HIDDEN_PAD, HIDDEN_PAD))
        stacks["bo"].append(jnp.zeros((1, HIDDEN_PAD), jnp.float32))
        stacks["g1"].append(pad_row(jnp.ones((HIDDEN,), jnp.float32), HIDDEN_PAD))
        stacks["b1"].append(jnp.zeros((1, HIDDEN_PAD), jnp.float32))
        stacks["w1"].append(
            pad2(w((HIDDEN, INTERMEDIATE)), HIDDEN_PAD, INTER_PAD).astype(jnp.bfloat16))
        stacks["bb1"].append(jnp.zeros((1, INTER_PAD), jnp.float32))
        stacks["w2"].append(
            pad2(w((INTERMEDIATE, HIDDEN)), INTER_PAD, HIDDEN_PAD).astype(jnp.bfloat16))
        stacks["bb2"].append(jnp.zeros((1, HIDDEN_PAD), jnp.float32))
        stacks["g2"].append(pad_row(jnp.ones((HIDDEN,), jnp.float32), HIDDEN_PAD))
        stacks["b2"].append(jnp.zeros((1, HIDDEN_PAD), jnp.float32))

    params = {
        "word_emb": w((VOCAB, HIDDEN)),
        "pos_emb": w((SEQ, HIDDEN)),
        "type_emb": w((2, HIDDEN)),
        "emb_ln_g": pad_row(jnp.ones((HIDDEN,), jnp.float32), HIDDEN_PAD),
        "emb_ln_b": jnp.zeros((1, HIDDEN_PAD), jnp.float32),
    }
    for n, lst in stacks.items():
        params[n] = jnp.stack(lst)                 # [L, ...]
    return params


# --------------------------------- main ----------------------------------------
if __name__ == "__main__":
    key = jax.random.PRNGKey(0)
    pkey, ikey = jax.random.split(key)

    params = init_params(pkey)
    input_ids = jax.random.randint(ikey, (BATCH, SEQ), 0, VOCAB, dtype=jnp.int32)
    attention_mask = jnp.ones((BATCH, SEQ), dtype=jnp.int32)

    fwd = jax.jit(transformer_forward)
    out = jax.block_until_ready(fwd(params, input_ids, attention_mask))

    assert out.shape == (BATCH, SEQ, HIDDEN)
    assert bool(jnp.all(jnp.isfinite(out)))
    # TODO(synk): HF AutoModel config variants (dropout, rel-pos embeddings,
    # pooler, token_type_ids != 0) are not modeled; this reproduces a standard
    # BERT-style encoder last_hidden_state path only.
    print("KERNEL_OK")
</pallas_src>

<mosaic_0001>
module attributes {stable_mosaic.version = 11 : i64} {
  func.func @fused_encoder_kernel(%arg0: i32, %arg1: memref<16x128xf32, #tpu.memory_space<vmem>>, %arg2: memref<2x8xf32, #tpu.memory_space<vmem>>, %arg3: memref<1x128xf32, #tpu.memory_space<vmem>>, %arg4: memref<1x128xf32, #tpu.memory_space<vmem>>, %arg5: memref<1x128x384xbf16, #tpu.memory_space<vmem>>, %arg6: memref<1x1x384xf32, #tpu.memory_space<vmem>>, %arg7: memref<1x128x128xf32, #tpu.memory_space<vmem>>, %arg8: memref<1x1x128xf32, #tpu.memory_space<vmem>>, %arg9: memref<1x1x128xf32, #tpu.memory_space<vmem>>, %arg10: memref<1x1x128xf32, #tpu.memory_space<vmem>>, %arg11: memref<1x128x128xbf16, #tpu.memory_space<vmem>>, %arg12: memref<1x1x128xf32, #tpu.memory_space<vmem>>, %arg13: memref<1x128x128xbf16, #tpu.memory_space<vmem>>, %arg14: memref<1x1x128xf32, #tpu.memory_space<vmem>>, %arg15: memref<1x1x128xf32, #tpu.memory_space<vmem>>, %arg16: memref<1x1x128xf32, #tpu.memory_space<vmem>>, %arg17: memref<16x128xf32, #tpu.memory_space<vmem>>) attributes {dimension_semantics = [#tpu.dimension_semantics<arbitrary>], iteration_bounds = array<i64: 2>, scalar_prefetch = 0 : i64, scratch_operands = 0 : i64, tpu.core_type = #tpu.core_type<tc>, window_params = [{pipeline_mode = #tpu.pipeline_mode<synchronous>, transform_indices = @transform_0, window_bounds = array<i64: 16, 128>}, {pipeline_mode = #tpu.pipeline_mode<synchronous>, transform_indices = @transform_1, window_bounds = array<i64: 2, 8>}, {pipeline_mode = #tpu.pipeline_mode<synchronous>, transform_indices = @transform_2, window_bounds = array<i64: 1, 128>}, {pipeline_mode = #tpu.pipeline_mode<synchronous>, transform_indices = @transform_3, window_bounds = array<i64: 1, 128>}, {transform_indices = @transform_4, window_bounds = array<i64: 1, 128, 384>}, {transform_indices = @transform_5, window_bounds = array<i64: 1, 1, 384>}, {transform_indices = @transform_6, window_bounds = array<i64: 1, 128, 128>}, {transform_indices = @transform_7, window_bounds = array<i64: 1, 1, 128>}, {transform_indices = @transform_8, window_bounds = array<i64: 1, 1, 128>}, {transform_indices = @transform_9, window_bounds = array<i64: 1, 1, 128>}, {transform_indices = @transform_10, window_bounds = array<i64: 1, 128, 128>}, {transform_indices = @transform_11, window_bounds = array<i64: 1, 1, 128>}, {transform_indices = @transform_12, window_bounds = array<i64: 1, 128, 128>}, {transform_indices = @transform_13, window_bounds = array<i64: 1, 1, 128>}, {transform_indices = @transform_14, window_bounds = array<i64: 1, 1, 128>}, {transform_indices = @transform_15, window_bounds = array<i64: 1, 1, 128>}, {pipeline_mode = #tpu.pipeline_mode<synchronous>, transform_indices = @transform_16, window_bounds = array<i64: 16, 128>}]} {
    %0 = tpu.iota {dimensions = array<i32: 1>} : vector<16x128xi32>
    %c32_i32 = arith.constant 32 : i32
    %1 = vector.broadcast %c32_i32 : i32 to vector<16x128xi32>
    %2 = arith.cmpi slt, %0, %1 : vector<16x128xi32>
    %3 = arith.extui %2 : vector<16x128xi1> to vector<16x128xi32>
    %4 = arith.sitofp %3 : vector<16x128xi32> to vector<16x128xf32>
    %c0_i32 = arith.constant 0 : i32
    %5 = arith.cmpi eq, %arg0, %c0_i32 : i32
    %6 = arith.extui %5 : i1 to i32
    %c0_i32_0 = arith.constant 0 : i32
    %7 = arith.cmpi ne, %6, %c0_i32_0 : i32
    scf.if %7 {
      %c0_89 = arith.constant 0 : index
      %c0_90 = arith.constant 0 : index
      %238 = vector.load %arg1[%c0_89, %c0_90] : memref<16x128xf32, #tpu.memory_space<vmem>>, vector<16x128xf32>
      %c0_91 = arith.constant 0 : index
      %c0_92 = arith.constant 0 : index
      %239 = vector.load %arg3[%c0_91, %c0_92] : memref<1x128xf32, #tpu.memory_space<vmem>>, vector<1x128xf32>
      %c0_93 = arith.constant 0 : index
      %c0_94 = arith.constant 0 : index
      %240 = vector.load %arg4[%c0_93, %c0_94] : memref<1x128xf32, #tpu.memory_space<vmem>>, vector<1x128xf32>
      %cst_95 = arith.constant dense<0.000000e+00> : vector<16xf32>
      %241 = vector.multi_reduction <add>, %238, %cst_95 [1] : vector<16x128xf32> to vector<16xf32>
      %242 = vector.shape_cast %241 : vector<16xf32> to vector<16x1xf32>
      %cst_96 = arith.constant 3.125000e-02 : f32
      %243 = vector.broadcast %cst_96 : f32 to vector<16x1xf32>
      %244 = arith.mulf %242, %243 : vector<16x1xf32>
      %245 = vector.broadcast %244 : vector<16x1xf32> to vector<16x128xf32>
      %246 = arith.subf %238, %245 : vector<16x128xf32>
      %247 = arith.mulf %246, %4 : vector<16x128xf32>
      %248 = arith.mulf %247, %247 : vector<16x128xf32>
      %cst_97 = arith.constant dense<0.000000e+00> : vector<16xf32>
      %249 = vector.multi_reduction <add>, %248, %cst_97 [1] : vector<16x128xf32> to vector<16xf32>
      %250 = vector.shape_cast %249 : vector<16xf32> to vector<16x1xf32>
      %cst_98 = arith.constant 3.125000e-02 : f32
      %251 = vector.broadcast %cst_98 : f32 to vector<16x1xf32>
      %252 = arith.mulf %250, %251 : vector<16x1xf32>
      %cst_99 = arith.constant 9.99999996E-13 : f32
      %253 = vector.broadcast %cst_99 : f32 to vector<16x1xf32>
      %254 = arith.addf %252, %253 : vector<16x1xf32>
      %255 = math.rsqrt %254 : vector<16x1xf32>
      %256 = vector.broadcast %255 : vector<16x1xf32> to vector<16x128xf32>
      %257 = arith.mulf %247, %256 : vector<16x128xf32>
      %258 = vector.broadcast %239 : vector<1x128xf32> to vector<16x128xf32>
      %259 = arith.mulf %257, %258 : vector<16x128xf32>
      %260 = vector.broadcast %240 : vector<1x128xf32> to vector<16x128xf32>
      %261 = arith.addf %259, %260 : vector<16x128xf32>
      %c0_100 = arith.constant 0 : index
      %c0_101 = arith.constant 0 : index
      %262 = vector.load %arg17[%c0_100, %c0_101] : memref<16x128xf32, #tpu.memory_space<vmem>>, vector<16x128xf32>
      tpu.vector_store %arg17[%c0_100, %c0_101], %261 {strides = array<i32>} : memref<16x128xf32, #tpu.memory_space<vmem>>, vector<16x128xf32>,
    } else {
    }
    %c0 = arith.constant 0 : index
    %c0_1 = arith.constant 0 : index
    %8 = vector.load %arg17[%c0, %c0_1] : memref<16x128xf32, #tpu.memory_space<vmem>>, vector<16x128xf32>
    %9 = arith.truncf %8 : vector<16x128xf32> to vector<16x128xbf16>
    %c0_2 = arith.constant 0 : index
    %c0_3 = arith.constant 0 : index
    %c0_4 = arith.constant 0 : index
    %10 = vector.load %arg5[%c0_2, %c0_3, %c0_4] : memref<1x128x384xbf16, #tpu.memory_space<vmem>>, vector<1x128x384xbf16>
    %11 = vector.shape_cast %10 : vector<1x128x384xbf16> to vector<128x384xbf16>
    %cst = arith.constant dense<0.000000e+00> : vector<16x384xf32>
    %12 = tpu.matmul %9, %11, %cst {dimension_numbers = #tpu.dot_dimension_numbers<[1], [0], [0], [1], [0, 0, 1, 1], [], []>} : vector<16x128xbf16>, vector<128x384xbf16>, vector<16x384xf32> -> vector<16x384xf32>
    %c0_5 = arith.constant 0 : index
    %c0_6 = arith.constant 0 : index
    %c0_7 = arith.constant 0 : index
    %13 = vector.load %arg6[%c0_5, %c0_6, %c0_7] : memref<1x1x384xf32, #tpu.memory_space<vmem>>, vector<1x1x384xf32>
    %14 = vector.shape_cast %13 : vector<1x1x384xf32> to vector<1x384xf32>
    %15 = vector.broadcast %14 : vector<1x384xf32> to vector<16x384xf32>
    %16 = arith.addf %12, %15 : vector<16x384xf32>
    %c0_8 = arith.constant 0 : index
    %c0_9 = arith.constant 0 : index
    %17 = vector.load %arg2[%c0_8, %c0_9] : memref<2x8xf32, #tpu.memory_space<vmem>>, vector<2x8xf32>
    %18 = vector.shape_cast %17 : vector<2x8xf32> to vector<2x1x8xf32>
    %cst_10 = arith.constant 0.000000e+00 : f32
    %19 = vector.broadcast %cst_10 : f32 to vector<16x128xf32>
    %20 = vector.extract_strided_slice %16 {offsets = [0, 0], sizes = [16, 8], strides = [1, 1]} : vector<16x384xf32> to vector<16x8xf32>
    %21 = vector.shape_cast %20 : vector<16x8xf32> to vector<2x8x8xf32>
    %22 = vector.extract_strided_slice %16 {offsets = [0, 128], sizes = [16, 8], strides = [1, 1]} : vector<16x384xf32> to vector<16x8xf32>
    %23 = vector.shape_cast %22 : vector<16x8xf32> to vector<2x8x8xf32>
    %24 = vector.extract_strided_slice %16 {offsets = [0, 256], sizes = [16, 8], strides = [1, 1]} : vector<16x384xf32> to vector<16x8xf32>
    %25 = vector.shape_cast %24 : vector<16x8xf32> to vector<2x8x8xf32>
    %26 = arith.truncf %21 : vector<2x8x8xf32> to vector<2x8x8xbf16>
    %27 = arith.truncf %23 : vector<2x8x8xf32> to vector<2x8x8xbf16>
    "tpu.trace_start"() <{level = 10 : i32, message = "bqd,bkd->bqk"}> : () -> ()
    %cst_11 = arith.constant dense<0.000000e+00> : vector<2x8x8xf32>
    %28 = tpu.matmul %26, %27, %cst_11 {dimension_numbers = #tpu.dot_dimension_numbers<[2], [2], [1], [1], [0, 0, 0, 1, 1, 1], [0], [0]>} : vector<2x8x8xbf16>, vector<2x8x8xbf16>, vector<2x8x8xf32> -> vector<2x8x8xf32>
    "tpu.trace_stop"() : () -> ()
    %cst_12 = arith.constant 0.353553385 : f32
    %29 = vector.broadcast %cst_12 : f32 to vector<2x8x8xf32>
    %30 = arith.mulf %28, %29 : vector<2x8x8xf32>
    %31 = vector.broadcast %18 : vector<2x1x8xf32> to vector<2x8x8xf32>
    %32 = arith.addf %30, %31 : vector<2x8x8xf32>
    %cst_13 = arith.constant dense<0xFF800000> : vector<2x8xf32>
    %33 = vector.multi_reduction <maximumf>, %32, %cst_13 [2] : vector<2x8x8xf32> to vector<2x8xf32>
    %34 = vector.shape_cast %33 : vector<2x8xf32> to vector<2x8x1xf32>
    %35 = vector.broadcast %34 : vector<2x8x1xf32> to vector<2x8x8xf32>
    %36 = arith.subf %32, %35 : vector<2x8x8xf32>
    %37 = math.exp %36 : vector<2x8x8xf32>
    %cst_14 = arith.constant dense<0.000000e+00> : vector<2x8xf32>
    %38 = vector.multi_reduction <add>, %37, %cst_14 [2] : vector<2x8x8xf32> to vector<2x8xf32>
    %39 = vector.shape_cast %38 : vector<2x8xf32> to vector<2x8x1xf32>
    %40 = tpu.reciprocal %39 {approx = true} : vector<2x8x1xf32> -> vector<2x8x1xf32>
    %41 = vector.broadcast %40 : vector<2x8x1xf32> to vector<2x8x8xf32>
    %42 = arith.mulf %37, %41 : vector<2x8x8xf32>
    %43 = arith.truncf %42 : vector<2x8x8xf32> to vector<2x8x8xbf16>
    %44 = arith.truncf %25 : vector<2x8x8xf32> to vector<2x8x8xbf16>
    "tpu.trace_start"() <{level = 10 : i32, message = "bqk,bkd->bqd"}> : () -> ()
    %cst_15 = arith.constant dense<0.000000e+00> : vector<2x8x8xf32>
    %45 = tpu.matmul %43, %44, %cst_15 {dimension_numbers = #tpu.dot_dimension_numbers<[2], [1], [1], [2], [0, 0, 0, 1, 1, 2], [0], [0]>} : vector<2x8x8xbf16>, vector<2x8x8xbf16>, vector<2x8x8xf32> -> vector<2x8x8xf32>
    "tpu.trace_stop"() : () -> ()
    %46 = vector.shape_cast %45 : vector<2x8x8xf32> to vector<16x8xf32>
    %47 = arith.truncf %46 : vector<16x8xf32> to vector<16x8xbf16>
    %c0_16 = arith.constant 0 : index
    %c0_17 = arith.constant 0 : index
    %c0_18 = arith.constant 0 : index
    %48 = vector.load %arg7[%c0_16, %c0_17, %c0_18] : memref<1x128x128xf32, #tpu.memory_space<vmem>>, vector<1x8x128xf32>
    %49 = vector.shape_cast %48 : vector<1x8x128xf32> to vector<8x128xf32>
    %50 = arith.truncf %49 : vector<8x128xf32> to vector<8x128xbf16>
    %cst_19 = arith.constant dense<0.000000e+00> : vector<16x128xf32>
    %51 = tpu.matmul %47, %50, %cst_19 {dimension_numbers = #tpu.dot_dimension_numbers<[1], [0], [0], [1], [0, 0, 1, 1], [], []>} : vector<16x8xbf16>, vector<8x128xbf16>, vector<16x128xf32> -> vector<16x128xf32>
    %52 = arith.addf %19, %51 : vector<16x128xf32>
    %53 = vector.extract_strided_slice %16 {offsets = [0, 8], sizes = [16, 8], strides = [1, 1]} : vector<16x384xf32> to vector<16x8xf32>
    %54 = vector.shape_cast %53 : vector<16x8xf32> to vector<2x8x8xf32>
    %55 = vector.extract_strided_slice %16 {offsets = [0, 136], sizes = [16, 8], strides = [1, 1]} : vector<16x384xf32> to vector<16x8xf32>
    %56 = vector.shape_cast %55 : vector<16x8xf32> to vector<2x8x8xf32>
    %57 = vector.extract_strided_slice %16 {offsets = [0, 264], sizes = [16, 8], strides = [1, 1]} : vector<16x384xf32> to vector<16x8xf32>
    %58 = vector.shape_cast %57 : vector<16x8xf32> to vector<2x8x8xf32>
    %59 = arith.truncf %54 : vector<2x8x8xf32> to vector<2x8x8xbf16>
    %60 = arith.truncf %56 : vector<2x8x8xf32> to vector<2x8x8xbf16>
    "tpu.trace_start"() <{level = 10 : i32, message = "bqd,bkd->bqk"}> : () -> ()
    %cst_20 = arith.constant dense<0.000000e+00> : vector<2x8x8xf32>
    %61 = tpu.matmul %59, %60, %cst_20 {dimension_numbers = #tpu.dot_dimension_numbers<[2], [2], [1], [1], [0, 0, 0, 1, 1, 1], [0], [0]>} : vector<2x8x8xbf16>, vector<2x8x8xbf16>, vector<2x8x8xf32> -> vector<2x8x8xf32>
    "tpu.trace_stop"() : () -> ()
    %cst_21 = arith.constant 0.353553385 : f32
    %62 = vector.broadcast %cst_21 : f32 to vector<2x8x8xf32>
    %63 = arith.mulf %61, %62 : vector<2x8x8xf32>
    %64 = vector.broadcast %18 : vector<2x1x8xf32> to vector<2x8x8xf32>
    %65 = arith.addf %63, %64 : vector<2x8x8xf32>
    %cst_22 = arith.constant dense<0xFF800000> : vector<2x8xf32>
    %66 = vector.multi_reduction <maximumf>, %65, %cst_22 [2] : vector<2x8x8xf32> to vector<2x8xf32>
    %67 = vector.shape_cast %66 : vector<2x8xf32> to vector<2x8x1xf32>
    %68 = vector.broadcast %67 : vector<2x8x1xf32> to vector<2x8x8xf32>
    %69 = arith.subf %65, %68 : vector<2x8x8xf32>
    %70 = math.exp %69 : vector<2x8x8xf32>
    %cst_23 = arith.constant dense<0.000000e+00> : vector<2x8xf32>
    %71 = vector.multi_reduction <add>, %70, %cst_23 [2] : vector<2x8x8xf32> to vector<2x8xf32>
    %72 = vector.shape_cast %71 : vector<2x8xf32> to vector<2x8x1xf32>
    %73 = tpu.reciprocal %72 {approx = true} : vector<2x8x1xf32> -> vector<2x8x1xf32>
    %74 = vector.broadcast %73 : vector<2x8x1xf32> to vector<2x8x8xf32>
    %75 = arith.mulf %70, %74 : vector<2x8x8xf32>
    %76 = arith.truncf %75 : vector<2x8x8xf32> to vector<2x8x8xbf16>
    %77 = arith.truncf %58 : vector<2x8x8xf32> to vector<2x8x8xbf16>
    "tpu.trace_start"() <{level = 10 : i32, message = "bqk,bkd->bqd"}> : () -> ()
    %cst_24 = arith.constant dense<0.000000e+00> : vector<2x8x8xf32>
    %78 = tpu.matmul %76, %77, %cst_24 {dimension_numbers = #tpu.dot_dimension_numbers<[2], [1], [1], [2], [0, 0, 0, 1, 1, 2], [0], [0]>} : vector<2x8x8xbf16>, vector<2x8x8xbf16>, vector<2x8x8xf32> -> vector<2x8x8xf32>
    "tpu.trace_stop"() : () -> ()
    %79 = vector.shape_cast %78 : vector<2x8x8xf32> to vector<16x8xf32>
    %80 = arith.truncf %79 : vector<16x8xf32> to vector<16x8xbf16>
    %c0_25 = arith.constant 0 : index
    %c8 = arith.constant 8 : index
    %c0_26 = arith.constant 0 : index
    %81 = vector.load %arg7[%c0_25, %c8, %c0_26] : memref<1x128x128xf32, #tpu.memory_space<vmem>>, vector<1x8x128xf32>
    %82 = vector.shape_cast %81 : vector<1x8x128xf32> to vector<8x128xf32>
    %83 = arith.truncf %82 : vector<8x128xf32> to vector<8x128xbf16>
    %cst_27 = arith.constant dense<0.000000e+00> : vector<16x128xf32>
    %84 = tpu.matmul %80, %83, %cst_27 {dimension_numbers = #tpu.dot_dimension_numbers<[1], [0], [0], [1], [0, 0, 1, 1], [], []>} : vector<16x8xbf16>, vector<8x128xbf16>, vector<16x128xf32> -> vector<16x128xf32>
    %85 = arith.addf %52, %84 : vector<16x128xf32>
    %86 = vector.extract_strided_slice %16 {offsets = [0, 16], sizes = [16, 8], strides = [1, 1]} : vector<16x384xf32> to vector<16x8xf32>
    %87 = vector.shape_cast %86 : vector<16x8xf32> to vector<2x8x8xf32>
    %88 = vector.extract_strided_slice %16 {offsets = [0, 144], sizes = [16, 8], strides = [1, 1]} : vector<16x384xf32> to vector<16x8xf32>
    %89 = vector.shape_cast %88 : vector<16x8xf32> to vector<2x8x8xf32>
    %90 = vector.extract_strided_slice %16 {offsets = [0, 272], sizes = [16, 8], strides = [1, 1]} : vector<16x384xf32> to vector<16x8xf32>
    %91 = vector.shape_cast %90 : vector<16x8xf32> to vector<2x8x8xf32>
    %92 = arith.truncf %87 : vector<2x8x8xf32> to vector<2x8x8xbf16>
    %93 = arith.truncf %89 : vector<2x8x8xf32> to vector<2x8x8xbf16>
    "tpu.trace_start"() <{level = 10 : i32, message = "bqd,bkd->bqk"}> : () -> ()
    %cst_28 = arith.constant dense<0.000000e+00> : vector<2x8x8xf32>
    %94 = tpu.matmul %92, %93, %cst_28 {dimension_numbers = #tpu.dot_dimension_numbers<[2], [2], [1], [1], [0, 0, 0, 1, 1, 1], [0], [0]>} : vector<2x8x8xbf16>, vector<2x8x8xbf16>, vector<2x8x8xf32> -> vector<2x8x8xf32>
    "tpu.trace_stop"() : () -> ()
    %cst_29 = arith.constant 0.353553385 : f32
    %95 = vector.broadcast %cst_29 : f32 to vector<2x8x8xf32>
    %96 = arith.mulf %94, %95 : vector<2x8x8xf32>
    %97 = vector.broadcast %18 : vector<2x1x8xf32> to vector<2x8x8xf32>
    %98 = arith.addf %96, %97 : vector<2x8x8xf32>
    %cst_30 = arith.constant dense<0xFF800000> : vector<2x8xf32>
    %99 = vector.multi_reduction <maximumf>, %98, %cst_30 [2] : vector<2x8x8xf32> to vector<2x8xf32>
    %100 = vector.shape_cast %99 : vector<2x8xf32> to vector<2x8x1xf32>
    %101 = vector.broadcast %100 : vector<2x8x1xf32> to vector<2x8x8xf32>
    %102 = arith.subf %98, %101 : vector<2x8x8xf32>
    %103 = math.exp %102 : vector<2x8x8xf32>
    %cst_31 = arith.constant dense<0.000000e+00> : vector<2x8xf32>
    %104 = vector.multi_reduction <add>, %103, %cst_31 [2] : vector<2x8x8xf32> to vector<2x8xf32>
    %105 = vector.shape_cast %104 : vector<2x8xf32> to vector<2x8x1xf32>
    %106 = tpu.reciprocal %105 {approx = true} : vector<2x8x1xf32> -> vector<2x8x1xf32>
    %107 = vector.broadcast %106 : vector<2x8x1xf32> to vector<2x8x8xf32>
    %108 = arith.mulf %103, %107 : vector<2x8x8xf32>
    %109 = arith.truncf %108 : vector<2x8x8xf32> to vector<2x8x8xbf16>
    %110 = arith.truncf %91 : vector<2x8x8xf32> to vector<2x8x8xbf16>
    "tpu.trace_start"() <{level = 10 : i32, message = "bqk,bkd->bqd"}> : () -> ()
    %cst_32 = arith.constant dense<0.000000e+00> : vector<2x8x8xf32>
    %111 = tpu.matmul %109, %110, %cst_32 {dimension_numbers = #tpu.dot_dimension_numbers<[2], [1], [1], [2], [0, 0, 0, 1, 1, 2], [0], [0]>} : vector<2x8x8xbf16>, vector<2x8x8xbf16>, vector<2x8x8xf32> -> vector<2x8x8xf32>
    "tpu.trace_stop"() : () -> ()
    %112 = vector.shape_cast %111 : vector<2x8x8xf32> to vector<16x8xf32>
    %113 = arith.truncf %112 : vector<16x8xf32> to vector<16x8xbf16>
    %c0_33 = arith.constant 0 : index
    %c16 = arith.constant 16 : index
    %c0_34 = arith.constant 0 : index
    %114 = vector.load %arg7[%c0_33, %c16, %c0_34] : memref<1x128x128xf32, #tpu.memory_space<vmem>>, vector<1x8x128xf32>
    %115 = vector.shape_cast %114 : vector<1x8x128xf32> to vector<8x128xf32>
    %116 = arith.truncf %115 : vector<8x128xf32> to vector<8x128xbf16>
    %cst_35 = arith.constant dense<0.000000e+00> : vector<16x128xf32>
    %117 = tpu.matmul %113, %116, %cst_35 {dimension_numbers = #tpu.dot_dimension_numbers<[1], [0], [0], [1], [0, 0, 1, 1], [], []>} : vector<16x8xbf16>, vector<8x128xbf16>, vector<16x128xf32> -> vector<16x128xf32>
    %118 = arith.addf %85, %117 : vector<16x128xf32>
    %119 = vector.extract_strided_slice %16 {offsets = [0, 24], sizes = [16, 8], strides = [1, 1]} : vector<16x384xf32> to vector<16x8xf32>
    %120 = vector.shape_cast %119 : vector<16x8xf32> to vector<2x8x8xf32>
    %121 = vector.extract_strided_slice %16 {offsets = [0, 152], sizes = [16, 8], strides = [1, 1]} : vector<16x384xf32> to vector<16x8xf32>
    %122 = vector.shape_cast %121 : vector<16x8xf32> to vector<2x8x8xf32>
    %123 = vector.extract_strided_slice %16 {offsets = [0, 280], sizes = [16, 8], strides = [1, 1]} : vector<16x384xf32> to vector<16x8xf32>
    %124 = vector.shape_cast %123 : vector<16x8xf32> to vector<2x8x8xf32>
    %125 = arith.truncf %120 : vector<2x8x8xf32> to vector<2x8x8xbf16>
    %126 = arith.truncf %122 : vector<2x8x8xf32> to vector<2x8x8xbf16>
    "tpu.trace_start"() <{level = 10 : i32, message = "bqd,bkd->bqk"}> : () -> ()
    %cst_36 = arith.constant dense<0.000000e+00> : vector<2x8x8xf32>
    %127 = tpu.matmul %125, %126, %cst_36 {dimension_numbers = #tpu.dot_dimension_numbers<[2], [2], [1], [1], [0, 0, 0, 1, 1, 1], [0], [0]>} : vector<2x8x8xbf16>, vector<2x8x8xbf16>, vector<2x8x8xf32> -> vector<2x8x8xf32>
    "tpu.trace_stop"() : () -> ()
    %cst_37 = arith.constant 0.353553385 : f32
    %128 = vector.broadcast %cst_37 : f32 to vector<2x8x8xf32>
    %129 = arith.mulf %127, %128 : vector<2x8x8xf32>
    %130 = vector.broadcast %18 : vector<2x1x8xf32> to vector<2x8x8xf32>
    %131 = arith.addf %129, %130 : vector<2x8x8xf32>
    %cst_38 = arith.constant dense<0xFF800000> : vector<2x8xf32>
    %132 = vector.multi_reduction <maximumf>, %131, %cst_38 [2] : vector<2x8x8xf32> to vector<2x8xf32>
    %133 = vector.shape_cast %132 : vector<2x8xf32> to vector<2x8x1xf32>
    %134 = vector.broadcast %133 : vector<2x8x1xf32> to vector<2x8x8xf32>
    %135 = arith.subf %131, %134 : vector<2x8x8xf32>
    %136 = math.exp %135 : vector<2x8x8xf32>
    %cst_39 = arith.constant dense<0.000000e+00> : vector<2x8xf32>
    %137 = vector.multi_reduction <add>, %136, %cst_39 [2] : vector<2x8x8xf32> to vector<2x8xf32>
    %138 = vector.shape_cast %137 : vector<2x8xf32> to vector<2x8x1xf32>
    %139 = tpu.reciprocal %138 {approx = true} : vector<2x8x1xf32> -> vector<2x8x1xf32>
    %140 = vector.broadcast %139 : vector<2x8x1xf32> to vector<2x8x8xf32>
    %141 = arith.mulf %136, %140 : vector<2x8x8xf32>
    %142 = arith.truncf %141 : vector<2x8x8xf32> to vector<2x8x8xbf16>
    %143 = arith.truncf %124 : vector<2x8x8xf32> to vector<2x8x8xbf16>
    "tpu.trace_start"() <{level = 10 : i32, message = "bqk,bkd->bqd"}> : () -> ()
    %cst_40 = arith.constant dense<0.000000e+00> : vector<2x8x8xf32>
    %144 = tpu.matmul %142, %143, %cst_40 {dimension_numbers = #tpu.dot_dimension_numbers<[2], [1], [1], [2], [0, 0, 0, 1, 1, 2], [0], [0]>} : vector<2x8x8xbf16>, vector<2x8x8xbf16>, vector<2x8x8xf32> -> vector<2x8x8xf32>
    "tpu.trace_stop"() : () -> ()
    %145 = vector.shape_cast %144 : vector<2x8x8xf32> to vector<16x8xf32>
    %146 = arith.truncf %145 : vector<16x8xf32> to vector<16x8xbf16>
    %c0_41 = arith.constant 0 : index
    %c24 = arith.constant 24 : index
    %c0_42 = arith.constant 0 : index
    %147 = vector.load %arg7[%c0_41, %c24, %c0_42] : memref<1x128x128xf32, #tpu.memory_space<vmem>>, vector<1x8x128xf32>
    %148 = vector.shape_cast %147 : vector<1x8x128xf32> to vector<8x128xf32>
    %149 = arith.truncf %148 : vector<8x128xf32> to vector<8x128xbf16>
    %cst_43 = arith.constant dense<0.000000e+00> : vector<16x128xf32>
    %150 = tpu.matmul %146, %149, %cst_43 {dimension_numbers = #tpu.dot_dimension_numbers<[1], [0], [0], [1], [0, 0, 1, 1], [], []>} : vector<16x8xbf16>, vector<8x128xbf16>, vector<16x128xf32> -> vector<16x128xf32>
    %151 = arith.addf %118, %150 : vector<16x128xf32>
    %c0_44 = arith.constant 0 : index
    %c0_45 = arith.constant 0 : index
    %c0_46 = arith.constant 0 : index
    %152 = vector.load %arg8[%c0_44, %c0_45, %c0_46] : memref<1x1x128xf32, #tpu.memory_space<vmem>>, vector<1x1x128xf32>
    %153 = vector.shape_cast %152 : vector<1x1x128xf32> to vector<1x128xf32>
    %154 = vector.broadcast %153 : vector<1x128xf32> to vector<16x128xf32>
    %155 = arith.addf %151, %154 : vector<16x128xf32>
    %156 = arith.addf %8, %155 : vector<16x128xf32>
    %c0_47 = arith.constant 0 : index
    %c0_48 = arith.constant 0 : index
    %c0_49 = arith.constant 0 : index
    %157 = vector.load %arg9[%c0_47, %c0_48, %c0_49] : memref<1x1x128xf32, #tpu.memory_space<vmem>>, vector<1x1x128xf32>
    %158 = vector.shape_cast %157 : vector<1x1x128xf32> to vector<1x128xf32>
    %c0_50 = arith.constant 0 : index
    %c0_51 = arith.constant 0 : index
    %c0_52 = arith.constant 0 : index
    %159 = vector.load %arg10[%c0_50, %c0_51, %c0_52] : memref<1x1x128xf32, #tpu.memory_space<vmem>>, vector<1x1x128xf32>
    %160 = vector.shape_cast %159 : vector<1x1x128xf32> to vector<1x128xf32>
    %cst_53 = arith.constant dense<0.000000e+00> : vector<16xf32>
    %161 = vector.multi_reduction <add>, %156, %cst_53 [1] : vector<16x128xf32> to vector<16xf32>
    %162 = vector.shape_cast %161 : vector<16xf32> to vector<16x1xf32>
    %cst_54 = arith.constant 3.125000e-02 : f32
    %163 = vector.broadcast %cst_54 : f32 to vector<16x1xf32>
    %164 = arith.mulf %162, %163 : vector<16x1xf32>
    %165 = vector.broadcast %164 : vector<16x1xf32> to vector<16x128xf32>
    %166 = arith.subf %156, %165 : vector<16x128xf32>
    %167 = arith.mulf %166, %4 : vector<16x128xf32>
    %168 = arith.mulf %167, %167 : vector<16x128xf32>
    %cst_55 = arith.constant dense<0.000000e+00> : vector<16xf32>
    %169 = vector.multi_reduction <add>, %168, %cst_55 [1] : vector<16x128xf32> to vector<16xf32>
    %170 = vector.shape_cast %169 : vector<16xf32> to vector<16x1xf32>
    %cst_56 = arith.constant 3.125000e-02 : f32
    %171 = vector.broadcast %cst_56 : f32 to vector<16x1xf32>
    %172 = arith.mulf %170, %171 : vector<16x1xf32>
    %cst_57 = arith.constant 9.99999996E-13 : f32
    %173 = vector.broadcast %cst_57 : f32 to vector<16x1xf32>
    %174 = arith.addf %172, %173 : vector<16x1xf32>
    %175 = math.rsqrt %174 : vector<16x1xf32>
    %176 = vector.broadcast %175 : vector<16x1xf32> to vector<16x128xf32>
    %177 = arith.mulf %167, %176 : vector<16x128xf32>
    %178 = vector.broadcast %158 : vector<1x128xf32> to vector<16x128xf32>
    %179 = arith.mulf %177, %178 : vector<16x128xf32>
    %180 = vector.broadcast %160 : vector<1x128xf32> to vector<16x128xf32>
    %181 = arith.addf %179, %180 : vector<16x128xf32>
    %182 = arith.truncf %181 : vector<16x128xf32> to vector<16x128xbf16>
    %c0_58 = arith.constant 0 : index
    %c0_59 = arith.constant 0 : index
    %c0_60 = arith.constant 0 : index
    %183 = vector.load %arg11[%c0_58, %c0_59, %c0_60] : memref<1x128x128xbf16, #tpu.memory_space<vmem>>, vector<1x128x128xbf16>
    %184 = vector.shape_cast %183 : vector<1x128x128xbf16> to vector<128x128xbf16>
    %cst_61 = arith.constant dense<0.000000e+00> : vector<16x128xf32>
    %185 = tpu.matmul %182, %184, %cst_61 {dimension_numbers = #tpu.dot_dimension_numbers<[1], [0], [0], [1], [0, 0, 1, 1], [], []>} : vector<16x128xbf16>, vector<128x128xbf16>, vector<16x128xf32> -> vector<16x128xf32>
    %c0_62 = arith.constant 0 : index
    %c0_63 = arith.constant 0 : index
    %c0_64 = arith.constant 0 : index
    %186 = vector.load %arg12[%c0_62, %c0_63, %c0_64] : memref<1x1x128xf32, #tpu.memory_space<vmem>>, vector<1x1x128xf32>
    %187 = vector.shape_cast %186 : vector<1x1x128xf32> to vector<1x128xf32>
    %188 = vector.broadcast %187 : vector<1x128xf32> to vector<16x128xf32>
    %189 = arith.addf %185, %188 : vector<16x128xf32>
    %190 = arith.mulf %189, %189 : vector<16x128xf32>
    %191 = arith.mulf %189, %190 : vector<16x128xf32>
    %cst_65 = arith.constant 4.471500e-02 : f32
    %192 = vector.broadcast %cst_65 : f32 to vector<16x128xf32>
    %193 = arith.mulf %192, %191 : vector<16x128xf32>
    %194 = arith.addf %189, %193 : vector<16x128xf32>
    %cst_66 = arith.constant 0.797884583 : f32
    %195 = vector.broadcast %cst_66 : f32 to vector<16x128xf32>
    %196 = arith.mulf %195, %194 : vector<16x128xf32>
    %197 = math.tanh %196 : vector<16x128xf32>
    %cst_67 = arith.constant 1.000000e+00 : f32
    %198 = vector.broadcast %cst_67 : f32 to vector<16x128xf32>
    %199 = arith.addf %198, %197 : vector<16x128xf32>
    %cst_68 = arith.constant 5.000000e-01 : f32
    %200 = vector.broadcast %cst_68 : f32 to vector<16x128xf32>
    %201 = arith.mulf %200, %199 : vector<16x128xf32>
    %202 = arith.mulf %189, %201 : vector<16x128xf32>
    %203 = arith.truncf %202 : vector<16x128xf32> to vector<16x128xbf16>
    %c0_69 = arith.constant 0 : index
    %c0_70 = arith.constant 0 : index
    %c0_71 = arith.constant 0 : index
    %204 = vector.load %arg13[%c0_69, %c0_70, %c0_71] : memref<1x128x128xbf16, #tpu.memory_space<vmem>>, vector<1x128x128xbf16>
    %205 = vector.shape_cast %204 : vector<1x128x128xbf16> to vector<128x128xbf16>
    %cst_72 = arith.constant dense<0.000000e+00> : vector<16x128xf32>
    %206 = tpu.matmul %203, %205, %cst_72 {dimension_numbers = #tpu.dot_dimension_numbers<[1], [0], [0], [1], [0, 0, 1, 1], [], []>} : vector<16x128xbf16>, vector<128x128xbf16>, vector<16x128xf32> -> vector<16x128xf32>
    %c0_73 = arith.constant 0 : index
    %c0_74 = arith.constant 0 : index
    %c0_75 = arith.constant 0 : index
    %207 = vector.load %arg14[%c0_73, %c0_74, %c0_75] : memref<1x1x128xf32, #tpu.memory_space<vmem>>, vector<1x1x128xf32>
    %208 = vector.shape_cast %207 : vector<1x1x128xf32> to vector<1x128xf32>
    %209 = vector.broadcast %208 : vector<1x128xf32> to vector<16x128xf32>
    %210 = arith.addf %206, %209 : vector<16x128xf32>
    %211 = arith.addf %181, %210 : vector<16x128xf32>
    %c0_76 = arith.constant 0 : index
    %c0_77 = arith.constant 0 : index
    %c0_78 = arith.constant 0 : index
    %212 = vector.load %arg15[%c0_76, %c0_77, %c0_78] : memref<1x1x128xf32, #tpu.memory_space<vmem>>, vector<1x1x128xf32>
    %213 = vector.shape_cast %212 : vector<1x1x128xf32> to vector<1x128xf32>
    %c0_79 = arith.constant 0 : index
    %c0_80 = arith.constant 0 : index
    %c0_81 = arith.constant 0 : index
    %214 = vector.load %arg16[%c0_79, %c0_80, %c0_81] : memref<1x1x128xf32, #tpu.memory_space<vmem>>, vector<1x1x128xf32>
    %215 = vector.shape_cast %214 : vector<1x1x128xf32> to vector<1x128xf32>
    %cst_82 = arith.constant dense<0.000000e+00> : vector<16xf32>
    %216 = vector.multi_reduction <add>, %211, %cst_82 [1] : vector<16x128xf32> to vector<16xf32>
    %217 = vector.shape_cast %216 : vector<16xf32> to vector<16x1xf32>
    %cst_83 = arith.constant 3.125000e-02 : f32
    %218 = vector.broadcast %cst_83 : f32 to vector<16x1xf32>
    %219 = arith.mulf %217, %218 : vector<16x1xf32>
    %220 = vector.broadcast %219 : vector<16x1xf32> to vector<16x128xf32>
    %221 = arith.subf %211, %220 : vector<16x128xf32>
    %222 = arith.mulf %221, %4 : vector<16x128xf32>
    %223 = arith.mulf %222, %222 : vector<16x128xf32>
    %cst_84 = arith.constant dense<0.000000e+00> : vector<16xf32>
    %224 = vector.multi_reduction <add>, %223, %cst_84 [1] : vector<16x128xf32> to vector<16xf32>
    %225 = vector.shape_cast %224 : vector<16xf32> to vector<16x1xf32>
    %cst_85 = arith.constant 3.125000e-02 : f32
    %226 = vector.broadcast %cst_85 : f32 to vector<16x1xf32>
    %227 = arith.mulf %225, %226 : vector<16x1xf32>
    %cst_86 = arith.constant 9.99999996E-13 : f32
    %228 = vector.broadcast %cst_86 : f32 to vector<16x1xf32>
    %229 = arith.addf %227, %228 : vector<16x1xf32>
    %230 = math.rsqrt %229 : vector<16x1xf32>
    %231 = vector.broadcast %230 : vector<16x1xf32> to vector<16x128xf32>
    %232 = arith.mulf %222, %231 : vector<16x128xf32>
    %233 = vector.broadcast %213 : vector<1x128xf32> to vector<16x128xf32>
    %234 = arith.mulf %232, %233 : vector<16x128xf32>
    %235 = vector.broadcast %215 : vector<1x128xf32> to vector<16x128xf32>
    %236 = arith.addf %234, %235 : vector<16x128xf32>
    %c0_87 = arith.constant 0 : index
    %c0_88 = arith.constant 0 : index
    %237 = vector.load %arg17[%c0_87, %c0_88] : memref<16x128xf32, #tpu.memory_space<vmem>>, vector<16x128xf32>
    tpu.vector_store %arg17[%c0_87, %c0_88], %236 {strides = array<i32>} : memref<16x128xf32, #tpu.memory_space<vmem>>, vector<16x128xf32>,
    return
  }
  func.func @transform_0(%arg0: i32) -> (i32, i32) {
    %c0_i32 = arith.constant 0 : i32
    %c0_i32_0 = arith.constant 0 : i32
    %c0_i32_1 = arith.constant 0 : i32
    return %c0_i32, %c0_i32_0 : i32, i32
  }
  func.func @transform_1(%arg0: i32) -> (i32, i32) {
    %c0_i32 = arith.constant 0 : i32
    %c0_i32_0 = arith.constant 0 : i32
    %c0_i32_1 = arith.constant 0 : i32
    return %c0_i32, %c0_i32_0 : i32, i32
  }
  func.func @transform_2(%arg0: i32) -> (i32, i32) {
    %c0_i32 = arith.constant 0 : i32
    %c0_i32_0 = arith.constant 0 : i32
    %c0_i32_1 = arith.constant 0 : i32
    return %c0_i32, %c0_i32_0 : i32, i32
  }
  func.func @transform_3(%arg0: i32) -> (i32, i32) {
    %c0_i32 = arith.constant 0 : i32
    %c0_i32_0 = arith.constant 0 : i32
    %c0_i32_1 = arith.constant 0 : i32
    return %c0_i32, %c0_i32_0 : i32, i32
  }
  func.func @transform_4(%arg0: i32) -> (i32, i32, i32) {
    %c0_i32 = arith.constant 0 : i32
    %c0_i32_0 = arith.constant 0 : i32
    %c0_i32_1 = arith.constant 0 : i32
    return %arg0, %c0_i32, %c0_i32_0 : i32, i32, i32
  }
  func.func @transform_5(%arg0: i32) -> (i32, i32, i32) {
    %c0_i32 = arith.constant 0 : i32
    %c0_i32_0 = arith.constant 0 : i32
    %c0_i32_1 = arith.constant 0 : i32
    return %arg0, %c0_i32, %c0_i32_0 : i32, i32, i32
  }
  func.func @transform_6(%arg0: i32) -> (i32, i32, i32) {
    %c0_i32 = arith.constant 0 : i32
    %c0_i32_0 = arith.constant 0 : i32
    %c0_i32_1 = arith.constant 0 : i32
    return %arg0, %c0_i32, %c0_i32_0 : i32, i32, i32
  }
  func.func @transform_7(%arg0: i32) -> (i32, i32, i32) {
    %c0_i32 = arith.constant 0 : i32
    %c0_i32_0 = arith.constant 0 : i32
    %c0_i32_1 = arith.constant 0 : i32
    return %arg0, %c0_i32, %c0_i32_0 : i32, i32, i32
  }
  func.func @transform_8(%arg0: i32) -> (i32, i32, i32) {
    %c0_i32 = arith.constant 0 : i32
    %c0_i32_0 = arith.constant 0 : i32
    %c0_i32_1 = arith.constant 0 : i32
    return %arg0, %c0_i32, %c0_i32_0 : i32, i32, i32
  }
  func.func @transform_9(%arg0: i32) -> (i32, i32, i32) {
    %c0_i32 = arith.constant 0 : i32
    %c0_i32_0 = arith.constant 0 : i32
    %c0_i32_1 = arith.constant 0 : i32
    return %arg0, %c0_i32, %c0_i32_0 : i32, i32, i32
  }
  func.func @transform_10(%arg0: i32) -> (i32, i32, i32) {
    %c0_i32 = arith.constant 0 : i32
    %c0_i32_0 = arith.constant 0 : i32
    %c0_i32_1 = arith.constant 0 : i32
    return %arg0, %c0_i32, %c0_i32_0 : i32, i32, i32
  }
  func.func @transform_11(%arg0: i32) -> (i32, i32, i32) {
    %c0_i32 = arith.constant 0 : i32
    %c0_i32_0 = arith.constant 0 : i32
    %c0_i32_1 = arith.constant 0 : i32
    return %arg0, %c0_i32, %c0_i32_0 : i32, i32, i32
  }
  func.func @transform_12(%arg0: i32) -> (i32, i32, i32) {
    %c0_i32 = arith.constant 0 : i32
    %c0_i32_0 = arith.constant 0 : i32
    %c0_i32_1 = arith.constant 0 : i32
    return %arg0, %c0_i32, %c0_i32_0 : i32, i32, i32
  }
  func.func @transform_13(%arg0: i32) -> (i32, i32, i32) {
    %c0_i32 = arith.constant 0 : i32
    %c0_i32_0 = arith.constant 0 : i32
    %c0_i32_1 = arith.constant 0 : i32
    return %arg0, %c0_i32, %c0_i32_0 : i32, i32, i32
  }
  func.func @transform_14(%arg0: i32) -> (i32, i32, i32) {
    %c0_i32 = arith.constant 0 : i32
    %c0_i32_0 = arith.constant 0 : i32
    %c0_i32_1 = arith.constant 0 : i32
    return %arg0, %c0_i32, %c0_i32_0 : i32, i32, i32
  }
  func.func @transform_15(%arg0: i32) -> (i32, i32, i32) {
    %c0_i32 = arith.constant 0 : i32
    %c0_i32_0 = arith.constant 0 : i32
    %c0_i32_1 = arith.constant 0 : i32
    return %arg0, %c0_i32, %c0_i32_0 : i32, i32, i32
  }
  func.func @transform_16(%arg0: i32) -> (i32, i32) {
    %c0_i32 = arith.constant 0 : i32
    %c0_i32_0 = arith.constant 0 : i32
    %c0_i32_1 = arith.constant 0 : i32
    return %c0_i32, %c0_i32_0 : i32, i32
  }
}

</mosaic_0001>

<llo_original>
// kernel: transformer_forward.1
$region0: #{transformer_forward.1}
  #allocation0 [shape = 'u32[]', space=smem, size = 0x4, offset = 0x4, fixed_abs, tag = 'smem constant byte address 0x4 - core index']
  #allocation1 [shape = 'u32[72,128]{1,0:T(1,128)}', space=vmem, size = 0x9000, scoped, tag = 'internal scratch']
  %s0 = inlined_call_operand.vmem [shape: f32[16,128], index: 0, kind: input, shape index: {}]
  %s1 = inlined_call_operand.vmem [shape: f32[2,8], index: 1, kind: input, shape index: {}]
  %s2 = inlined_call_operand.vmem [shape: f32[1,128], index: 2, kind: input, shape index: {}]
  %s3 = inlined_call_operand.vmem [shape: f32[1,128], index: 3, kind: input, shape index: {}]
  %s4 = inlined_call_operand.hbm [shape: bf16[2,128,384], index: 4, kind: input, shape index: {}]
  %s5 = inlined_call_operand.vmem [shape: f32[2,1,384], index: 5, kind: input, shape index: {}]
  %s6 = inlined_call_operand.hbm [shape: f32[2,128,128], index: 6, kind: input, shape index: {}]
  %s7 = inlined_call_operand.vmem [shape: f32[2,1,128], index: 7, kind: input, shape index: {}]
  %s8 = inlined_call_operand.vmem [shape: f32[2,1,128], index: 8, kind: input, shape index: {}]
  %s9 = inlined_call_operand.vmem [shape: f32[2,1,128], index: 9, kind: input, shape index: {}]
  %s10 = inlined_call_operand.vmem [shape: bf16[2,128,128], index: 10, kind: input, shape index: {}]
  %s11 = inlined_call_operand.vmem [shape: f32[2,1,128], index: 11, kind: input, shape index: {}]
  %s12 = inlined_call_operand.hbm [shape: bf16[2,128,128], index: 12, kind: input, shape index: {}]
  %s13 = inlined_call_operand.vmem [shape: f32[2,1,128], index: 13, kind: input, shape index: {}]
  %s14 = inlined_call_operand.vmem [shape: f32[2,1,128], index: 14, kind: input, shape index: {}]
  %s15 = inlined_call_operand.vmem [shape: f32[2,1,128], index: 15, kind: input, shape index: {}]
  %s16 = inlined_call_operand.vmem [shape: f32[16,128], index: 16, kind: output, shape index: {}]
  %s17 = sld [smem:[#allocation0]]
  $region113: #{transformer_forward.1} parent=0
    _
  %s19 = ssub.s32 1, %s17
  %s20 = scalar_select 0, %s19, %s17
  $region1: #{transformer_forward.1} parent=0
    #allocation2 [shape = 'u8[196608]{0}', space=vmem, size = 0x30000, scoped, tag = 'input window, operand 4']
    #allocation3 [shape = 's32[2]{0}', space=sflag, size = 0x8, scoped, tag = 'scoped memory for transformer_forward.1']
    #allocation4 [shape = 'u8[131072]{0}', space=vmem, size = 0x20000, scoped, tag = 'input window, operand 6']
    #allocation5 [shape = 's32[2]{0}', space=sflag, size = 0x8, scoped, tag = 'scoped memory for transformer_forward.1']
    #allocation6 [shape = 'u8[65536]{0}', space=vmem, size = 0x10000, scoped, tag = 'input window, operand 12']
    %21 = vsyncpa [#allocation3], 0
    %s22 = scalar_lea.sflag [#allocation3], 1
    %23 = vsyncpa %s22, 0
    %24 = vsyncpa [#allocation5], 0
    %s25 = scalar_lea.sflag [#allocation5], 1
    %26 = vsyncpa %s25, 0
    loop: start=0, step=1, limit=4
    $region2: #{transformer_forward.1} parent=1 // loop_pre_header
      _
    $region3: #{transformer_forward.1} parent=1 // loop_header
      %s28 = sphi 0, %s32
      %p29 = scmp.ge.s32.totalorder %s28, 4
      %s36 = sphi 0, %s36
      %s38 = sphi 0, %s36
      %s39 = sphi 0, %s38
      %s53 = sphi 0, %s39
      %s57 = sphi 0, %s57
      %s59 = sphi 0, %s57
      %s60 = sphi 0, %s59
      %s74 = sphi 0, %s60
      %s78 = sphi 0, %s78
      %s80 = sphi 0, %s78
      %s81 = sphi 0, %s80
      %s95 = sphi 0, %s81
      %s99 = sphi 0, %s99
      %s101 = sphi 0, %s99
      %s102 = sphi 0, %s101
      %s116 = sphi 0, %s102
      %s122 = sphi 0, %s124
      %s125 = sphi 0, %s122
      %s126 = sphi 0, %s125
      %s142 = sphi 0, %s126
      %s148 = sphi 0, %s150
      %s151 = sphi 0, %s148
      %s152 = sphi 0, %s151
      %s168 = sphi 0, %s152
      %s174 = sphi 0, %s176
      %s177 = sphi 0, %s174
      %s178 = sphi 0, %s177
      %s194 = sphi 0, %s178
      %s200 = sphi 0, %s202
      %s203 = sphi 0, %s200
      %s204 = sphi 0, %s203
      %s220 = sphi 0, %s204
      %s226 = sphi 0, %s228
      %s229 = sphi 0, %s226
      %s230 = sphi 0, %s229
      %s246 = sphi 0, %s230
      %s252 = sphi 0, %s254
      %s255 = sphi 0, %s252
      %s256 = sphi 0, %s255
      %s272 = sphi 0, %s256
      %s278 = sphi 0, %s280
      %s281 = sphi 0, %s278
      %s282 = sphi 0, %s281
      %s298 = sphi 0, %s282
      %s304 = sphi 0, %s306
      %s307 = sphi 0, %s304
      %s308 = sphi 0, %s307
      %s324 = sphi 0, %s308
      %s330 = sphi 0, %s332
      %s333 = sphi 0, %s330
      %s334 = sphi 0, %s333
      %s350 = sphi 0, %s334
      %s356 = sphi 0, %s358
      %s359 = sphi 0, %s356
      %s360 = sphi 0, %s359
      %s376 = sphi 0, %s360
      %s382 = sphi 0, %s384
      %s385 = sphi 0, %s382
      %s386 = sphi 0, %s385
      %s402 = sphi 0, %s386
      %s408 = sphi 0, %s410
      %s411 = sphi 0, %s408
      %s412 = sphi 0, %s411
      %s428 = sphi 0, %s412
      %s432 = sphi 0, %s432
      %s434 = sphi 0, %s432
      %s435 = sphi 0, %s434
      %s449 = sphi 0, %s435
    $region4: #{transformer_forward.1} parent=1 // loop_header_branch
      %31 = sbr.rel (%p29) target = $region8
    $region5: #{transformer_forward.1} parent=1 // loop_body
      %s33 = ssub.s32 %s28, 1
      %s34 = ssub.s32 %s28, 2
      %s35 = sadd.s32 %s28, 1
      %s37 = sadd.s32 %s36, 1
      %p40 = scmp.eq.s32.totalorder %s28, 1
      %p41 = scmp.ne.s32.totalorder %s36, %s38
      %p42 = scmp.eq.s32.totalorder %s28, 0
      %p43 = por %p41, %p42
      %p44 = scmp.ne.s32.totalorder %s36, %s38
      %p45 = scmp.eq.s32.totalorder %s33, 1
      %p46 = por %p44, %p45
      %p47 = scmp.ne.s32.totalorder %s38, %s39
      %p48 = scmp.eq.s32.totalorder %s33, 0
      %p49 = por %p47, %p48
      %p50 = scmp.ne.s32.totalorder %s38, %s39
      %p51 = scmp.eq.s32.totalorder %s34, 1
      %p52 = por %p50, %p51
      %p54 = scmp.ne.s32.totalorder %s39, %s53
      %p55 = scmp.eq.s32.totalorder %s34, 0
      %p56 = por %p54, %p55
      %s58 = sadd.s32 %s57, 1
      %p61 = scmp.eq.s32.totalorder %s28, 1
      %p62 = scmp.ne.s32.totalorder %s57, %s59
      %p63 = scmp.eq.s32.totalorder %s28, 0
      %p64 = por %p62, %p63
      %p65 = scmp.ne.s32.totalorder %s57, %s59
      %p66 = scmp.eq.s32.totalorder %s33, 1
      %p67 = por %p65, %p66
      %p68 = scmp.ne.s32.totalorder %s59, %s60
      %p69 = scmp.eq.s32.totalorder %s33, 0
      %p70 = por %p68, %p69
      %p71 = scmp.ne.s32.totalorder %s59, %s60
      %p72 = scmp.eq.s32.totalorder %s34, 1
      %p73 = por %p71, %p72
      %p75 = scmp.ne.s32.totalorder %s60, %s74
      %p76 = scmp.eq.s32.totalorder %s34, 0
      %p77 = por %p75, %p76
      %s79 = sadd.s32 %s78, 1
      %p82 = scmp.eq.s32.totalorder %s28, 1
      %p83 = scmp.ne.s32.totalorder %s78, %s80
      %p84 = scmp.eq.s32.totalorder %s28, 0
      %p85 = por %p83, %p84
      %p86 = scmp.ne.s32.totalorder %s78, %s80
      %p87 = scmp.eq.s32.totalorder %s33, 1
      %p88 = por %p86, %p87
      %p89 = scmp.ne.s32.totalorder %s80, %s81
      %p90 = scmp.eq.s32.totalorder %s33, 0
      %p91 = por %p89, %p90
      %p92 = scmp.ne.s32.totalorder %s80, %s81
      %p93 = scmp.eq.s32.totalorder %s34, 1
      %p94 = por %p92, %p93
      %p96 = scmp.ne.s32.totalorder %s81, %s95
      %p97 = scmp.eq.s32.totalorder %s34, 0
      %p98 = por %p96, %p97
      %s100 = sadd.s32 %s99, 1
      %p103 = scmp.eq.s32.totalorder %s28, 1
      %p104 = scmp.ne.s32.totalorder %s99, %s101
      %p105 = scmp.eq.s32.totalorder %s28, 0
      %p106 = por %p104, %p105
      %p107 = scmp.ne.s32.totalorder %s99, %s101
      %p108 = scmp.eq.s32.totalorder %s33, 1
      %p109 = por %p107, %p108
      %p110 = scmp.ne.s32.totalorder %s101, %s102
      %p111 = scmp.eq.s32.totalorder %s33, 0
      %p112 = por %p110, %p111
      %p113 = scmp.ne.s32.totalorder %s101, %s102
      %p114 = scmp.eq.s32.totalorder %s34, 1
      %p115 = por %p113, %p114
      %p117 = scmp.ne.s32.totalorder %s102, %s116
      %p118 = scmp.eq.s32.totalorder %s34, 0
      %p119 = por %p117, %p118
      %s120 = ssub.s32 %s28, %s35
      %p121 = scmp.eq.s32.totalorder %s120, 0
      %s123 = sadd.s32 %s122, 1
      %s124 = scalar_select %p121, %s122, %s123
      %p127 = pneg %p121
      %p128 = scmp.eq.s32.totalorder %s28, 1
      %p129 = por %p127, %p128
      %p130 = scmp.ne.s32.totalorder %s122, %s125
      %p131 = scmp.eq.s32.totalorder %s28, 0
      %p132 = por %p130, %p131
      %p133 = scmp.ne.s32.totalorder %s122, %s125
      %p134 = scmp.eq.s32.totalorder %s33, 1
      %p135 = por %p133, %p134
      %p136 = scmp.ne.s32.totalorder %s125, %s126
      %p137 = scmp.eq.s32.totalorder %s33, 0
      %p138 = por %p136, %p137
      %p139 = scmp.ne.s32.totalorder %s125, %s126
      %p140 = scmp.eq.s32.totalorder %s34, 1
      %p141 = por %p139, %p140
      %p143 = scmp.ne.s32.totalorder %s126, %s142
      %p144 = scmp.eq.s32.totalorder %s34, 0
      %p145 = por %p143, %p144
      %s146 = ssub.s32 %s28, %s35
      %p147 = scmp.eq.s32.totalorder %s146, 0
      %s149 = sadd.s32 %s148, 1
      %s150 = scalar_select %p147, %s148, %s149
      %p153 = pneg %p147
      %p154 = scmp.eq.s32.totalorder %s28, 1
      %p155 = por %p153, %p154
      %p156 = scmp.ne.s32.totalorder %s148, %s151
      %p157 = scmp.eq.s32.totalorder %s28, 0
      %p158 = por %p156, %p157
      %p159 = scmp.ne.s32.totalorder %s148, %s151
      %p160 = scmp.eq.s32.totalorder %s33, 1
      %p161 = por %p159, %p160
      %p162 = scmp.ne.s32.totalorder %s151, %s152
      %p163 = scmp.eq.s32.totalorder %s33, 0
      %p164 = por %p162, %p163
      %p165 = scmp.ne.s32.totalorder %s151, %s152
      %p166 = scmp.eq.s32.totalorder %s34, 1
      %p167 = por %p165, %p166
      %p169 = scmp.ne.s32.totalorder %s152, %s168
      %p170 = scmp.eq.s32.totalorder %s34, 0
      %p171 = por %p169, %p170
      %s172 = ssub.s32 %s28, %s35
      %p173 = scmp.eq.s32.totalorder %s172, 0
      %s175 = sadd.s32 %s174, 1
      %s176 = scalar_select %p173, %s174, %s175
      %p179 = pneg %p173
      %p180 = scmp.eq.s32.totalorder %s28, 1
      %p181 = por %p179, %p180
      %p182 = scmp.ne.s32.totalorder %s174, %s177
      %p183 = scmp.eq.s32.totalorder %s28, 0
      %p184 = por %p182, %p183
      %p185 = scmp.ne.s32.totalorder %s174, %s177
      %p186 = scmp.eq.s32.totalorder %s33, 1
      %p187 = por %p185, %p186
      %p188 = scmp.ne.s32.totalorder %s177, %s178
      %p189 = scmp.eq.s32.totalorder %s33, 0
      %p190 = por %p188, %p189
      %p191 = scmp.ne.s32.totalorder %s177, %s178
      %p192 = scmp.eq.s32.totalorder %s34, 1
      %p193 = por %p191, %p192
      %p195 = scmp.ne.s32.totalorder %s178, %s194
      %p196 = scmp.eq.s32.totalorder %s34, 0
      %p197 = por %p195, %p196
      %s198 = ssub.s32 %s28, %s35
      %p199 = scmp.eq.s32.totalorder %s198, 0
      %s201 = sadd.s32 %s200, 1
      %s202 = scalar_select %p199, %s200, %s201
      %p205 = pneg %p199
      %p206 = scmp.eq.s32.totalorder %s28, 1
      %p207 = por %p205, %p206
      %p208 = scmp.ne.s32.totalorder %s200, %s203
      %p209 = scmp.eq.s32.totalorder %s28, 0
      %p210 = por %p208, %p209
      %p211 = scmp.ne.s32.totalorder %s200, %s203
      %p212 = scmp.eq.s32.totalorder %s33, 1
      %p213 = por %p211, %p212
      %p214 = scmp.ne.s32.totalorder %s203, %s204
      %p215 = scmp.eq.s32.totalorder %s33, 0
      %p216 = por %p214, %p215
      %p217 = scmp.ne.s32.totalorder %s203, %s204
      %p218 = scmp.eq.s32.totalorder %s34, 1
      %p219 = por %p217, %p218
      %p221 = scmp.ne.s32.totalorder %s204, %s220
      %p222 = scmp.eq.s32.totalorder %s34, 0
      %p223 = por %p221, %p222
      %s224 = ssub.s32 %s28, %s35
      %p225 = scmp.eq.s32.totalorder %s224, 0
      %s227 = sadd.s32 %s226, 1
      %s228 = scalar_select %p225, %s226, %s227
      %p231 = pneg %p225
      %p232 = scmp.eq.s32.totalorder %s28, 1
      %p233 = por %p231, %p232
      %p234 = scmp.ne.s32.totalorder %s226, %s229
      %p235 = scmp.eq.s32.totalorder %s28, 0
      %p236 = por %p234, %p235
      %p237 = scmp.ne.s32.totalorder %s226, %s229
      %p238 = scmp.eq.s32.totalorder %s33, 1
      %p239 = por %p237, %p238
      %p240 = scmp.ne.s32.totalorder %s229, %s230
      %p241 = scmp.eq.s32.totalorder %s33, 0
      %p242 = por %p240, %p241
      %p243 = scmp.ne.s32.totalorder %s229, %s230
      %p244 = scmp.eq.s32.totalorder %s34, 1
      %p245 = por %p243, %p244
      %p247 = scmp.ne.s32.totalorder %s230, %s246
      %p248 = scmp.eq.s32.totalorder %s34, 0
      %p249 = por %p247, %p248
      %s250 = ssub.s32 %s28, %s35
      %p251 = scmp.eq.s32.totalorder %s250, 0
      %s253 = sadd.s32 %s252, 1
      %s254 = scalar_select %p251, %s252, %s253
      %p257 = pneg %p251
      %p258 = scmp.eq.s32.totalorder %s28, 1
      %p259 = por %p257, %p258
      %p260 = scmp.ne.s32.totalorder %s252, %s255
      %p261 = scmp.eq.s32.totalorder %s28, 0
      %p262 = por %p260, %p261
      %p263 = scmp.ne.s32.totalorder %s252, %s255
      %p264 = scmp.eq.s32.totalorder %s33, 1
      %p265 = por %p263, %p264
      %p266 = scmp.ne.s32.totalorder %s255, %s256
      %p267 = scmp.eq.s32.totalorder %s33, 0
      %p268 = por %p266, %p267
      %p269 = scmp.ne.s32.totalorder %s255, %s256
      %p270 = scmp.eq.s32.totalorder %s34, 1
      %p271 = por %p269, %p270
      %p273 = scmp.ne.s32.totalorder %s256, %s272
      %p274 = scmp.eq.s32.totalorder %s34, 0
      %p275 = por %p273, %p274
      %s276 = ssub.s32 %s28, %s35
      %p277 = scmp.eq.s32.totalorder %s276, 0
      %s279 = sadd.s32 %s278, 1
      %s280 = scalar_select %p277, %s278, %s279
      %p283 = pneg %p277
      %p284 = scmp.eq.s32.totalorder %s28, 1
      %p285 = por %p283, %p284
      %p286 = scmp.ne.s32.totalorder %s278, %s281
      %p287 = scmp.eq.s32.totalorder %s28, 0
      %p288 = por %p286, %p287
      %p289 = scmp.ne.s32.totalorder %s278, %s281
      %p290 = scmp.eq.s32.totalorder %s33, 1
      %p291 = por %p289, %p290
      %p292 = scmp.ne.s32.totalorder %s281, %s282
      %p293 = scmp.eq.s32.totalorder %s33, 0
      %p294 = por %p292, %p293
      %p295 = scmp.ne.s32.totalorder %s281, %s282
      %p296 = scmp.eq.s32.totalorder %s34, 1
      %p297 = por %p295, %p296
      %p299 = scmp.ne.s32.totalorder %s282, %s298
      %p300 = scmp.eq.s32.totalorder %s34, 0
      %p301 = por %p299, %p300
      %s302 = ssub.s32 %s28, %s35
      %p303 = scmp.eq.s32.totalorder %s302, 0
      %s305 = sadd.s32 %s304, 1
      %s306 = scalar_select %p303, %s304, %s305
      %p309 = pneg %p303
      %p310 = scmp.eq.s32.totalorder %s28, 1
      %p311 = por %p309, %p310
      %p312 = scmp.ne.s32.totalorder %s304, %s307
      %p313 = scmp.eq.s32.totalorder %s28, 0
      %p314 = por %p312, %p313
      %p315 = scmp.ne.s32.totalorder %s304, %s307
      %p316 = scmp.eq.s32.totalorder %s33, 1
      %p317 = por %p315, %p316
      %p318 = scmp.ne.s32.totalorder %s307, %s308
      %p319 = scmp.eq.s32.totalorder %s33, 0
      %p320 = por %p318, %p319
      %p321 = scmp.ne.s32.totalorder %s307, %s308
      %p322 = scmp.eq.s32.totalorder %s34, 1
      %p323 = por %p321, %p322
      %p325 = scmp.ne.s32.totalorder %s308, %s324
      %p326 = scmp.eq.s32.totalorder %s34, 0
      %p327 = por %p325, %p326
      %s328 = ssub.s32 %s28, %s35
      %p329 = scmp.eq.s32.totalorder %s328, 0
      %s331 = sadd.s32 %s330, 1
      %s332 = scalar_select %p329, %s330, %s331
      %p335 = pneg %p329
      %p336 = scmp.eq.s32.totalorder %s28, 1
      %p337 = por %p335, %p336
      %p338 = scmp.ne.s32.totalorder %s330, %s333
      %p339 = scmp.eq.s32.totalorder %s28, 0
      %p340 = por %p338, %p339
      %p341 = scmp.ne.s32.totalorder %s330, %s333
      %p342 = scmp.eq.s32.totalorder %s33, 1
      %p343 = por %p341, %p342
      %p344 = scmp.ne.s32.totalorder %s333, %s334
      %p345 = scmp.eq.s32.totalorder %s33, 0
      %p346 = por %p344, %p345
      %p347 = scmp.ne.s32.totalorder %s333, %s334
      %p348 = scmp.eq.s32.totalorder %s34, 1
      %p349 = por %p347, %p348
      %p351 = scmp.ne.s32.totalorder %s334, %s350
      %p352 = scmp.eq.s32.totalorder %s34, 0
      %p353 = por %p351, %p352
      %s354 = ssub.s32 %s28, %s35
      %p355 = scmp.eq.s32.totalorder %s354, 0
      %s357 = sadd.s32 %s356, 1
      %s358 = scalar_select %p355, %s356, %s357
      %p361 = pneg %p355
      %p362 = scmp.eq.s32.totalorder %s28, 1
      %p363 = por %p361, %p362
      %p364 = scmp.ne.s32.totalorder %s356, %s359
      %p365 = scmp.eq.s32.totalorder %s28, 0
      %p366 = por %p364, %p365
      %p367 = scmp.ne.s32.totalorder %s356, %s359
      %p368 = scmp.eq.s32.totalorder %s33, 1
      %p369 = por %p367, %p368
      %p370 = scmp.ne.s32.totalorder %s359, %s360
      %p371 = scmp.eq.s32.totalorder %s33, 0
      %p372 = por %p370, %p371
      %p373 = scmp.ne.s32.totalorder %s359, %s360
      %p374 = scmp.eq.s32.totalorder %s34, 1
      %p375 = por %p373, %p374
      %p377 = scmp.ne.s32.totalorder %s360, %s376
      %p378 = scmp.eq.s32.totalorder %s34, 0
      %p379 = por %p377, %p378
      %s380 = ssub.s32 %s28, %s35
      %p381 = scmp.eq.s32.totalorder %s380, 0
      %s383 = sadd.s32 %s382, 1
      %s384 = scalar_select %p381, %s382, %s383
      %p387 = pneg %p381
      %p388 = scmp.eq.s32.totalorder %s28, 1
      %p389 = por %p387, %p388
      %p390 = scmp.ne.s32.totalorder %s382, %s385
      %p391 = scmp.eq.s32.totalorder %s28, 0
      %p392 = por %p390, %p391
      %p393 = scmp.ne.s32.totalorder %s382, %s385
      %p394 = scmp.eq.s32.totalorder %s33, 1
      %p395 = por %p393, %p394
      %p396 = scmp.ne.s32.totalorder %s385, %s386
      %p397 = scmp.eq.s32.totalorder %s33, 0
      %p398 = por %p396, %p397
      %p399 = scmp.ne.s32.totalorder %s385, %s386
      %p400 = scmp.eq.s32.totalorder %s34, 1
      %p401 = por %p399, %p400
      %p403 = scmp.ne.s32.totalorder %s386, %s402
      %p404 = scmp.eq.s32.totalorder %s34, 0
      %p405 = por %p403, %p404
      %s406 = ssub.s32 %s28, %s35
      %p407 = scmp.eq.s32.totalorder %s406, 0
      %s409 = sadd.s32 %s408, 1
      %s410 = scalar_select %p407, %s408, %s409
      %p413 = pneg %p407
      %p414 = scmp.eq.s32.totalorder %s28, 1
      %p415 = por %p413, %p414
      %p416 = scmp.ne.s32.totalorder %s408, %s411
      %p417 = scmp.eq.s32.totalorder %s28, 0
      %p418 = por %p416, %p417
      %p419 = scmp.ne.s32.totalorder %s408, %s411
      %p420 = scmp.eq.s32.totalorder %s33, 1
      %p421 = por %p419, %p420
      %p422 = scmp.ne.s32.totalorder %s411, %s412
      %p423 = scmp.eq.s32.totalorder %s33, 0
      %p424 = por %p422, %p423
      %p425 = scmp.ne.s32.totalorder %s411, %s412
      %p426 = scmp.eq.s32.totalorder %s34, 1
      %p427 = por %p425, %p426
      %p429 = scmp.ne.s32.totalorder %s412, %s428
      %p430 = scmp.eq.s32.totalorder %s34, 0
      %p431 = por %p429, %p430
      %s433 = sadd.s32 %s432, 1
      %p436 = scmp.eq.s32.totalorder %s28, 1
      %p437 = scmp.ne.s32.totalorder %s432, %s434
      %p438 = scmp.eq.s32.totalorder %s28, 0
      %p439 = por %p437, %p438
      %p440 = scmp.ne.s32.totalorder %s432, %s434
      %p441 = scmp.eq.s32.totalorder %s33, 1
      %p442 = por %p440, %p441
      %p443 = scmp.ne.s32.totalorder %s434, %s435
      %p444 = scmp.eq.s32.totalorder %s33, 0
      %p445 = por %p443, %p444
      %p446 = scmp.ne.s32.totalorder %s434, %s435
      %p447 = scmp.eq.s32.totalorder %s34, 1
      %p448 = por %p446, %p447
      %p450 = scmp.ne.s32.totalorder %s435, %s449
      %p451 = scmp.eq.s32.totalorder %s34, 0
      %p452 = por %p450, %p451
      %p453 = scmp.le.s32.totalorder 1, %s28
      %p454 = scmp.lt.s32.totalorder %s28, 3
      %p455 = pnand %p453, %p454
      %p456 = pneg %p455
      // Predicated region
      $region9: #{transformer_forward.1} parent=5 // pred_check
        _
      $region10: #{transformer_forward.1} parent=5 // pred_check_branch
        %458 = sbr.rel (%p455) target = $region12
      $region11: #{transformer_forward.1} parent=5 // pred_region
        %s459 = ssub.s32 %s28, 1
        // Predicated region
        $region13: #{transformer_forward.1} parent=11 // pred_check
          %p460 = pneg %p49
        $region14: #{transformer_forward.1} parent=11 // pred_check_branch
          %462 = sbr.rel (%p460) target = $region16
        $region15: #{transformer_forward.1} parent=11 // pred_region
          _
        $region16: #{transformer_forward.1} parent=11 // pred_fallthru
          _
        // Predicated region
        $region17: #{transformer_forward.1} parent=11 // pred_check
          %p463 = pneg %p70
        $region18: #{transformer_forward.1} parent=11 // pred_check_branch
          %465 = sbr.rel (%p463) target = $region20
        $region19: #{transformer_forward.1} parent=11 // pred_region
          _
        $region20: #{transformer_forward.1} parent=11 // pred_fallthru
          _
        // Predicated region
        $region21: #{transformer_forward.1} parent=11 // pred_check
          %p466 = pneg %p91
        $region22: #{transformer_forward.1} parent=11 // pred_check_branch
          %468 = sbr.rel (%p466) target = $region24
        $region23: #{transformer_forward.1} parent=11 // pred_region
          _
        $region24: #{transformer_forward.1} parent=11 // pred_fallthru
          _
        // Predicated region
        $region25: #{transformer_forward.1} parent=11 // pred_check
          %p469 = pneg %p112
        $region26: #{transformer_forward.1} parent=11 // pred_check_branch
          %471 = sbr.rel (%p469) target = $region28
        $region27: #{transformer_forward.1} parent=11 // pred_region
          _
        $region28: #{transformer_forward.1} parent=11 // pred_fallthru
          _
      $region12: #{transformer_forward.1} parent=5 // pred_fallthru
        _
      %p472 = scmp.lt.s32.totalorder %s28, 2
      // Predicated region
      $region29: #{transformer_forward.1} parent=5 // pred_check
        %p473 = pneg %p472
      $region30: #{transformer_forward.1} parent=5 // pred_check_branch
        %475 = sbr.rel (%p473) target = $region32
      $region31: #{transformer_forward.1} parent=5 // pred_region
        // Predicated region
        $region33: #{transformer_forward.1} parent=31 // pred_check
          %p476 = pneg %p132
        $region34: #{transformer_forward.1} parent=31 // pred_check_branch
          %478 = sbr.rel (%p476) target = $region36
        $region35: #{transformer_forward.1} parent=31 // pred_region
          %s479 = sand.u32 %s122, 1
          %s480 = scalar_lea.sflag [#allocation3], %s479
          %s481 = sand.u32 %s122, 1
          %s482 = smul.addr %s481, 192
          %s483 = scalar_lea.vmem [#allocation2], %s482
          %485 = vsyncadd %s480, 0
          %s486 = smul.addr %s28, 48
          %s487 = smul.addr %s486, 4
          %s488 = scalar_lea.hbm %s4, %s487
          %s489 = sshll.u32 %s488, 4
          %s490 = int_to_ptr.hbm [resolvable:$true] %s489
          %s491 = sshll.u32 %s483, 4
          %s492 = int_to_ptr.vmem [resolvable:$true] %s491
          %497 = dma.hbm_to_vmem [thread:$0]  %s490, 3072, %s492, %s480, 192, 192, 12
        $region36: #{transformer_forward.1} parent=31 // pred_fallthru
          _
        // Predicated region
        $region37: #{transformer_forward.1} parent=31 // pred_check
          %p498 = pneg %p158
        $region38: #{transformer_forward.1} parent=31 // pred_check_branch
          %500 = sbr.rel (%p498) target = $region40
        $region39: #{transformer_forward.1} parent=31 // pred_region
          %p501 = scmp.lt.s32.totalorder %s28, 1
          %s502 = scalar_select %p501, %s28, 1
          %s503 = smul.addr %s502, 3
          %s504 = scalar_lea.vmem %s5, %s503
        $region40: #{transformer_forward.1} parent=31 // pred_fallthru
          _
        // Predicated region
        $region41: #{transformer_forward.1} parent=31 // pred_check
          %p505 = pneg %p184
        $region42: #{transformer_forward.1} parent=31 // pred_check_branch
          %507 = sbr.rel (%p505) target = $region44
        $region43: #{transformer_forward.1} parent=31 // pred_region
          %s508 = sand.u32 %s28, 1
          %s509 = scalar_lea.sflag [#allocation5], %s508
          %s510 = sand.u32 %s174, 1
          %s511 = smul.addr %s510, 128
          %s512 = scalar_lea.vmem [#allocation4], %s511
          %514 = vsyncadd %s509, 0
          %s515 = smul.addr %s28, 16
          %s516 = smul.addr %s515, 8
          %s517 = scalar_lea.hbm %s6, %s516
          %s518 = sshll.u32 %s517, 4
          %s519 = int_to_ptr.hbm [resolvable:$true] %s518
          %s520 = sshll.u32 %s512, 4
          %s521 = int_to_ptr.vmem [resolvable:$true] %s520
          %526 = dma.hbm_to_vmem [thread:$0]  %s519, 2048, %s521, %s509, 128, 128, 8
        $region44: #{transformer_forward.1} parent=31 // pred_fallthru
          _
        // Predicated region
        $region45: #{transformer_forward.1} parent=31 // pred_check
          %p527 = pneg %p210
        $region46: #{transformer_forward.1} parent=31 // pred_check_branch
          %529 = sbr.rel (%p527) target = $region48
        $region47: #{transformer_forward.1} parent=31 // pred_region
          %p530 = scmp.lt.s32.totalorder %s28, 1
          %s531 = scalar_select %p530, %s28, 1
          %s532 = scalar_lea.vmem %s7, %s531
        $region48: #{transformer_forward.1} parent=31 // pred_fallthru
          _
        // Predicated region
        $region49: #{transformer_forward.1} parent=31 // pred_check
          %p533 = pneg %p236
        $region50: #{transformer_forward.1} parent=31 // pred_check_branch
          %535 = sbr.rel (%p533) target = $region52
        $region51: #{transformer_forward.1} parent=31 // pred_region
          %p536 = scmp.lt.s32.totalorder %s28, 1
          %s537 = scalar_select %p536, %s28, 1
          %s538 = scalar_lea.vmem %s8, %s537
        $region52: #{transformer_forward.1} parent=31 // pred_fallthru
          _
        // Predicated region
        $region53: #{transformer_forward.1} parent=31 // pred_check
          %p539 = pneg %p262
        $region54: #{transformer_forward.1} parent=31 // pred_check_branch
          %541 = sbr.rel (%p539) target = $region56
        $region55: #{transformer_forward.1} parent=31 // pred_region
          %p542 = scmp.lt.s32.totalorder %s28, 1
          %s543 = scalar_select %p542, %s28, 1
          %s544 = scalar_lea.vmem %s9, %s543
        $region56: #{transformer_forward.1} parent=31 // pred_fallthru
          _
        // Predicated region
        $region57: #{transformer_forward.1} parent=31 // pred_check
          %p545 = pneg %p288
        $region58: #{transformer_forward.1} parent=31 // pred_check_branch
          %547 = sbr.rel (%p545) target = $region60
        $region59: #{transformer_forward.1} parent=31 // pred_region
          %p548 = scmp.lt.s32.totalorder %s28, 1
          %s549 = scalar_select %p548, %s28, 1
          %s550 = smul.addr %s549, 16
          %s551 = smul.addr %s550, 4
          %s552 = scalar_lea.vmem %s10, %s551
        $region60: #{transformer_forward.1} parent=31 // pred_fallthru
          _
        // Predicated region
        $region61: #{transformer_forward.1} parent=31 // pred_check
          %p553 = pneg %p314
        $region62: #{transformer_forward.1} parent=31 // pred_check_branch
          %555 = sbr.rel (%p553) target = $region64
        $region63: #{transformer_forward.1} parent=31 // pred_region
          %p556 = scmp.lt.s32.totalorder %s28, 1
          %s557 = scalar_select %p556, %s28, 1
          %s558 = scalar_lea.vmem %s11, %s557
        $region64: #{transformer_forward.1} parent=31 // pred_fallthru
          _
        // Predicated region
        $region65: #{transformer_forward.1} parent=31 // pred_check
          %p559 = pneg %p340
        $region66: #{transformer_forward.1} parent=31 // pred_check_branch
          %561 = sbr.rel (%p559) target = $region68
        $region67: #{transformer_forward.1} parent=31 // pred_region
          %s562 = sand.u32 %s28, 1
          %s563 = scalar_lea.sflag [#allocation5], %s562
          %s564 = sand.u32 %s330, 1
          %s565 = smul.addr %s564, 64
          %s566 = scalar_lea.vmem [#allocation6], %s565
          %568 = vsyncadd %s563, 0
          %s569 = smul.addr %s28, 16
          %s570 = smul.addr %s569, 4
          %s571 = scalar_lea.hbm %s12, %s570
          %s572 = sshll.u32 %s571, 4
          %s573 = int_to_ptr.hbm [resolvable:$true] %s572
          %s574 = sshll.u32 %s566, 4
          %s575 = int_to_ptr.vmem [resolvable:$true] %s574
          %580 = dma.hbm_to_vmem [thread:$0]  %s573, 1024, %s575, %s563, 64, 64, 4
        $region68: #{transformer_forward.1} parent=31 // pred_fallthru
          _
        // Predicated region
        $region69: #{transformer_forward.1} parent=31 // pred_check
          %p581 = pneg %p366
        $region70: #{transformer_forward.1} parent=31 // pred_check_branch
          %583 = sbr.rel (%p581) target = $region72
        $region71: #{transformer_forward.1} parent=31 // pred_region
          %p584 = scmp.lt.s32.totalorder %s28, 1
          %s585 = scalar_select %p584, %s28, 1
          %s586 = scalar_lea.vmem %s13, %s585
        $region72: #{transformer_forward.1} parent=31 // pred_fallthru
          _
        // Predicated region
        $region73: #{transformer_forward.1} parent=31 // pred_check
          %p587 = pneg %p392
        $region74: #{transformer_forward.1} parent=31 // pred_check_branch
          %589 = sbr.rel (%p587) target = $region76
        $region75: #{transformer_forward.1} parent=31 // pred_region
          %p590 = scmp.lt.s32.totalorder %s28, 1
          %s591 = scalar_select %p590, %s28, 1
          %s592 = scalar_lea.vmem %s14, %s591
        $region76: #{transformer_forward.1} parent=31 // pred_fallthru
          _
        // Predicated region
        $region77: #{transformer_forward.1} parent=31 // pred_check
          %p593 = pneg %p418
        $region78: #{transformer_forward.1} parent=31 // pred_check_branch
          %595 = sbr.rel (%p593) target = $region80
        $region79: #{transformer_forward.1} parent=31 // pred_region
          %p596 = scmp.lt.s32.totalorder %s28, 1
          %s597 = scalar_select %p596, %s28, 1
          %s598 = scalar_lea.vmem %s15, %s597
        $region80: #{transformer_forward.1} parent=31 // pred_fallthru
          _
      $region32: #{transformer_forward.1} parent=5 // pred_fallthru
        _
      %p599 = scmp.le.s32.totalorder 1, %s28
      %p600 = scmp.lt.s32.totalorder %s28, 3
      %p601 = pnand %p599, %p600
      %p602 = pneg %p601
      // Predicated region
      $region81: #{transformer_forward.1} parent=5 // pred_check
        _
      $region82: #{transformer_forward.1} parent=5 // pred_check_branch
        %604 = sbr.rel (%p601) target = $region84
      $region83: #{transformer_forward.1} parent=5 // pred_region
        %s605 = ssub.s32 %s28, 1
        %s606 = sand.u32 %s125, 1
        %s607 = scalar_lea.sflag [#allocation3], %s606
        %s608 = sand.u32 %s125, 1
        %s609 = smul.addr %s608, 192
        %s610 = scalar_lea.vmem [#allocation2], %s609
        // Predicated region
        $region85: #{transformer_forward.1} parent=83 // pred_check
          %p611 = pneg %p138
        $region86: #{transformer_forward.1} parent=83 // pred_check_branch
          %613 = sbr.rel (%p611) target = $region88
        $region87: #{transformer_forward.1} parent=83 // pred_region
          %615 = dma.done %s607, 3072
        $region88: #{transformer_forward.1} parent=83 // pred_fallthru
          _
        %s616 = sand.u32 %s33, 1
        %s617 = scalar_lea.sflag [#allocation5], %s616
        %s618 = sand.u32 %s177, 1
        %s619 = smul.addr %s618, 128
        %s620 = scalar_lea.vmem [#allocation4], %s619
        // Predicated region
        $region89: #{transformer_forward.1} parent=83 // pred_check
          %p621 = pneg %p190
        $region90: #{transformer_forward.1} parent=83 // pred_check_branch
          %623 = sbr.rel (%p621) target = $region92
        $region91: #{transformer_forward.1} parent=83 // pred_region
          %625 = dma.done %s617, 2048
        $region92: #{transformer_forward.1} parent=83 // pred_fallthru
          _
        %s626 = sand.u32 %s33, 1
        %s627 = scalar_lea.sflag [#allocation5], %s626
        %s628 = sand.u32 %s333, 1
        %s629 = smul.addr %s628, 64
        %s630 = scalar_lea.vmem [#allocation6], %s629
        // Predicated region
        $region93: #{transformer_forward.1} parent=83 // pred_check
          %p631 = pneg %p346
        $region94: #{transformer_forward.1} parent=83 // pred_check_branch
          %633 = sbr.rel (%p631) target = $region96
        $region95: #{transformer_forward.1} parent=83 // pred_region
          %635 = dma.done %s627, 1024
        $region96: #{transformer_forward.1} parent=83 // pred_fallthru
          _
        %p636 = pneg %p49
        %p637 = pneg %p46
        %p638 = pneg %p70
        %p639 = pneg %p67
        %p640 = pneg %p91
        %p641 = pneg %p88
        %p642 = pneg %p112
        %p643 = pneg %p109
        %s644 = sand.u32 %s125, 1
        %s645 = scalar_lea.sflag [#allocation3], %s644
        %s646 = sand.u32 %s125, 1
        %s647 = smul.addr %s646, 192
        %s648 = scalar_lea.vmem [#allocation2], %s647
        %p649 = pneg %p138
        %p650 = pneg %p135
        %p651 = scmp.lt.s32.totalorder %s33, 1
        %s652 = scalar_select %p651, %s33, 1
        %s653 = smul.addr %s652, 3
        %s654 = scalar_lea.vmem %s5, %s653
        %p655 = pneg %p164
        %p656 = pneg %p161
        %s657 = sand.u32 %s33, 1
        %s658 = scalar_lea.sflag [#allocation5], %s657
        %s659 = sand.u32 %s177, 1
        %s660 = smul.addr %s659, 128
        %s661 = scalar_lea.vmem [#allocation4], %s660
        %p662 = pneg %p190
        %p663 = pneg %p187
        %p664 = scmp.lt.s32.totalorder %s33, 1
        %s665 = scalar_select %p664, %s33, 1
        %s666 = scalar_lea.vmem %s7, %s665
        %p667 = pneg %p216
        %p668 = pneg %p213
        %p669 = scmp.lt.s32.totalorder %s33, 1
        %s670 = scalar_select %p669, %s33, 1
        %s671 = scalar_lea.vmem %s8, %s670
        %p672 = pneg %p242
        %p673 = pneg %p239
        %p674 = scmp.lt.s32.totalorder %s33, 1
        %s675 = scalar_select %p674, %s33, 1
        %s676 = scalar_lea.vmem %s9, %s675
        %p677 = pneg %p268
        %p678 = pneg %p265
        %p679 = scmp.lt.s32.totalorder %s33, 1
        %s680 = scalar_select %p679, %s33, 1
        %s681 = smul.addr %s680, 16
        %s682 = smul.addr %s681, 4
        %s683 = scalar_lea.vmem %s10, %s682
        %p684 = pneg %p294
        %p685 = pneg %p291
        %p686 = scmp.lt.s32.totalorder %s33, 1
        %s687 = scalar_select %p686, %s33, 1
        %s688 = scalar_lea.vmem %s11, %s687
        %p689 = pneg %p320
        %p690 = pneg %p317
        %s691 = sand.u32 %s33, 1
        %s692 = scalar_lea.sflag [#allocation5], %s691
        %s693 = sand.u32 %s333, 1
        %s694 = smul.addr %s693, 64
        %s695 = scalar_lea.vmem [#allocation6], %s694
        %p696 = pneg %p346
        %p697 = pneg %p343
        %p698 = scmp.lt.s32.totalorder %s33, 1
        %s699 = scalar_select %p698, %s33, 1
        %s700 = scalar_lea.vmem %s13, %s699
        %p701 = pneg %p372
        %p702 = pneg %p369
        %p703 = scmp.lt.s32.totalorder %s33, 1
        %s704 = scalar_select %p703, %s33, 1
        %s705 = scalar_lea.vmem %s14, %s704
        %p706 = pneg %p398
        %p707 = pneg %p395
        %p708 = scmp.lt.s32.totalorder %s33, 1
        %s709 = scalar_select %p708, %s33, 1
        %s710 = scalar_lea.vmem %s15, %s709
        %p711 = pneg %p424
        %p712 = pneg %p421
        %p713 = pneg %p445
        %p714 = pneg %p442
        %p715 = scmp.lt.s32.totalorder %s33, 1
        %s716 = scalar_select %p715, %s33, 1
        %s717 = smul.addr %s716, 3
        %s718 = scalar_lea.vmem %s5, %s717
        %p719 = scmp.lt.s32.totalorder %s33, 1
        %s720 = scalar_select %p719, %s33, 1
        %s721 = scalar_lea.vmem %s7, %s720
        %p722 = scmp.lt.s32.totalorder %s33, 1
        %s723 = scalar_select %p722, %s33, 1
        %s724 = scalar_lea.vmem %s8, %s723
        %p725 = scmp.lt.s32.totalorder %s33, 1
        %s726 = scalar_select %p725, %s33, 1
        %s727 = scalar_lea.vmem %s9, %s726
        %p728 = scmp.lt.s32.totalorder %s33, 1
        %s729 = scalar_select %p728, %s33, 1
        %s730 = smul.addr %s729, 16
        %s731 = smul.addr %s730, 4
        %s732 = scalar_lea.vmem %s10, %s731
        %p733 = scmp.lt.s32.totalorder %s33, 1
        %s734 = scalar_select %p733, %s33, 1
        %s735 = scalar_lea.vmem %s11, %s734
        %p736 = scmp.lt.s32.totalorder %s33, 1
        %s737 = scalar_select %p736, %s33, 1
        %s738 = scalar_lea.vmem %s13, %s737
        %p739 = scmp.lt.s32.totalorder %s33, 1
        %s740 = scalar_select %p739, %s33, 1
        %s741 = scalar_lea.vmem %s14, %s740
        %p742 = scmp.lt.s32.totalorder %s33, 1
        %s743 = scalar_select %p742, %s33, 1
        %s744 = scalar_lea.vmem %s15, %s743
        %v746 = vlaneseq
        %v747 = vand.u32 %v746, 127
        %vm748 = vcmp.lt.s32.totalorder %v747, 32
        %v749 = vsel %vm748, 1, 0
        %v750 = vcvt.s32.f32 %v749
        %p751 = scmp.eq.s32.totalorder %s33, 0
        // Predicated region
        $region97: #{transformer_forward.1} parent=83 // pred_check
          %p752 = pneg %p751
        $region98: #{transformer_forward.1} parent=83 // pred_check_branch
          %754 = sbr.rel (%p752) target = $region100
        $region99: #{transformer_forward.1} parent=83 // pred_region
          %v755 = vld [vmem:[%s0] sm:$0xff]
          %v756 = vld [vmem:[%s0 + $0x8] sm:$0xff]
          %v757 = vld [vmem:[%s2] sm:$0x1]
          %v758 = vld [vmem:[%s3] sm:$0x1]
          %759 = vadd.xlane.f32.xlu0 %v755
          %v760 = vpop.xlane.xlu0 %759
          %761 = vadd.xlane.f32.xlu0 %v756
          %v762 = vpop.xlane.xlu0 %761
          %v763 = vmul.f32 %v760, 0.03125
          %v764 = vmul.f32 %v762, 0.03125
          %v765 = vsub.f32 %v755, %v763
          %v766 = vsub.f32 %v756, %v764
          %v767 = vmul.f32 %v765, %v750
          %v768 = vmul.f32 %v766, %v750
          %v769 = vmul.f32 %v767, %v767
          %v770 = vmul.f32 %v768, %v768
          %771 = vadd.xlane.f32.xlu0 %v769
          %v772 = vpop.xlane.xlu0 %771
          %773 = vadd.xlane.f32.xlu0 %v770
          %v774 = vpop.xlane.xlu0 %773
          %v775 = vmul.f32 %v772, 0.03125
          %v776 = vmul.f32 %v774, 0.03125
          %v777 = vadd.f32 %v775, 1e-12
          %v778 = vadd.f32 %v776, 1e-12
          %v779 = vrsqrt.pop %v777
          %v780 = vmul.f32 %v779, %v777
          %v781 = vmul.f32 %v780, %v779
          %v782 = vmul.f32 0.5, %v781
          %v783 = vsub.f32 1.5, %v782
          %v784 = vmul.f32 %v779, %v783
          %vm785 = vweird.f32 %v777
          %vm786 = vweird.f32 %v779
          %vm787 = vmor %vm785, %vm786
          %v788 = vsel %vm787, %v779, %v784
          %v789 = vrsqrt.pop %v778
          %v790 = vmul.f32 %v789, %v778
          %v791 = vmul.f32 %v790, %v789
          %v792 = vmul.f32 0.5, %v791
          %v793 = vsub.f32 1.5, %v792
          %v794 = vmul.f32 %v789, %v793
          %vm795 = vweird.f32 %v778
          %vm796 = vweird.f32 %v789
          %vm797 = vmor %vm795, %vm796
          %v798 = vsel %vm797, %v789, %v794
          %v799 = vmul.f32 %v767, %v788
          %v800 = vmul.f32 %v768, %v798
          %v802 = vperm.slane %v757, 0
          %v804 = vmul.f32 %v799, %v802
          %v805 = vmul.f32 %v800, %v802
          %v807 = vperm.slane %v758, 0
          %v809 = vadd.f32 %v804, %v807
          %v810 = vadd.f32 %v805, %v807
          %811 = vst [vmem:[%s16] sm:$0xff] %v809
          %812 = vst [vmem:[%s16 + $0x8] sm:$0xff] %v810
        $region100: #{transformer_forward.1} parent=83 // pred_fallthru
          _
        %v813 = vld [vmem:[%s16] sm:$0xff]
        %v814 = vld [vmem:[%s16 + $0x8] sm:$0xff]
        %v815 = vpack.c.bf16 %v814, %v813
        %v816 = vld [vmem:[%s610] sm:$0xff]
        %v817 = vld [vmem:[%s610 + $0x8] sm:$0xf]
        %v818 = vld [vmem:[%s610 + $0xc] sm:$0xff]
        %v819 = vld [vmem:[%s610 + $0x14] sm:$0xf]
        %v820 = vld [vmem:[%s610 + $0x18] sm:$0xff]
        %v821 = vld [vmem:[%s610 + $0x20] sm:$0xf]
        %v822 = vld [vmem:[%s610 + $0x24] sm:$0xff]
        %v823 = vld [vmem:[%s610 + $0x2c] sm:$0xf]
        %v824 = vld [vmem:[%s610 + $0x30] sm:$0xff]
        %v825 = vld [vmem:[%s610 + $0x38] sm:$0xf]
        %v826 = vld [vmem:[%s610 + $0x3c] sm:$0xff]
        %v827 = vld [vmem:[%s610 + $0x44] sm:$0xf]
        %v828 = vld [vmem:[%s610 + $0x48] sm:$0xff]
        %v829 = vld [vmem:[%s610 + $0x50] sm:$0xf]
        %v830 = vld [vmem:[%s610 + $0x54] sm:$0xff]
        %v831 = vld [vmem:[%s610 + $0x5c] sm:$0xf]
        %v832 = vld [vmem:[%s610 + $0x60] sm:$0xff]
        %v833 = vld [vmem:[%s610 + $0x68] sm:$0xf]
        %v834 = vld [vmem:[%s610 + $0x6c] sm:$0xff]
        %v835 = vld [vmem:[%s610 + $0x74] sm:$0xf]
        %v836 = vld [vmem:[%s610 + $0x78] sm:$0xff]
        %v837 = vld [vmem:[%s610 + $0x80] sm:$0xf]
        %v838 = vld [vmem:[%s610 + $0x84] sm:$0xff]
        %v839 = vld [vmem:[%s610 + $0x8c] sm:$0xf]
        %v840 = vld [vmem:[%s610 + $0x90] sm:$0xff]
        %v841 = vld [vmem:[%s610 + $0x98] sm:$0xf]
        %v842 = vld [vmem:[%s610 + $0x9c] sm:$0xff]
        %v843 = vld [vmem:[%s610 + $0xa4] sm:$0xf]
        %v844 = vld [vmem:[%s610 + $0xa8] sm:$0xff]
        %v845 = vld [vmem:[%s610 + $0xb0] sm:$0xf]
        %v846 = vld [vmem:[%s610 + $0xb4] sm:$0xff]
        %v847 = vld [vmem:[%s610 + $0xbc] sm:$0xf]
        %v848 = vld [vmem:[%s718] sm:$0x7]
        %v850 = vperm.slane %v848, 0
        %v851 = vperm.slane %v848, 1
        %v852 = vperm.slane %v848, 2
        %v888 = vunpack.c.l.b16 %v816
        %v889 = vunpack.c.h.b16 %v816
        %v890 = vunpack.c.l.b16 %v817
        %v891 = vunpack.c.l.b16 %v818
        %v892 = vunpack.c.h.b16 %v818
        %v893 = vunpack.c.l.b16 %v819
        %v894 = vunpack.c.l.b16 %v820
        %v895 = vunpack.c.h.b16 %v820
        %v896 = vunpack.c.l.b16 %v821
        %v897 = vunpack.c.l.b16 %v822
        %v898 = vunpack.c.h.b16 %v822
        %v899 = vunpack.c.l.b16 %v823
        %v900 = vunpack.c.l.b16 %v824
        %v901 = vunpack.c.h.b16 %v824
        %v902 = vunpack.c.l.b16 %v825
        %v903 = vunpack.c.l.b16 %v826
        %v904 = vunpack.c.h.b16 %v826
        %v905 = vunpack.c.l.b16 %v827
        %v906 = vunpack.c.l.b16 %v828
        %v907 = vunpack.c.h.b16 %v828
        %v908 = vunpack.c.l.b16 %v829
        %v909 = vunpack.c.l.b16 %v830
        %v910 = vunpack.c.h.b16 %v830
        %v911 = vunpack.c.l.b16 %v831
        %v912 = vunpack.c.l.b16 %v832
        %v913 = vunpack.c.h.b16 %v832
        %v914 = vunpack.c.l.b16 %v833
        %v915 = vunpack.c.l.b16 %v834
        %v916 = vunpack.c.h.b16 %v834
        %v917 = vunpack.c.l.b16 %v835
        %v918 = vunpack.c.l.b16 %v836
        %v919 = vunpack.c.h.b16 %v836
        %v920 = vunpack.c.l.b16 %v837
        %v921 = vunpack.c.l.b16 %v838
        %v922 = vunpack.c.h.b16 %v838
        %v923 = vunpack.c.l.b16 %v839
        %v924 = vunpack.c.l.b16 %v840
        %v925 = vunpack.c.h.b16 %v840
        %v926 = vunpack.c.l.b16 %v841
        %v927 = vunpack.c.l.b16 %v842
        %v928 = vunpack.c.h.b16 %v842
        %v929 = vunpack.c.l.b16 %v843
        %v930 = vunpack.c.l.b16 %v844
        %v931 = vunpack.c.h.b16 %v844
        %v932 = vunpack.c.l.b16 %v845
        %v933 = vunpack.c.l.b16 %v846
        %v934 = vunpack.c.h.b16 %v846
        %v935 = vunpack.c.l.b16 %v847
        %v936 = vpack.c.b16 %v891, %v888
        %v937 = vpack.c.b16 %v892, %v889
        %v938 = vpack.c.b16 %v893, %v890
        %v939 = vpack.c.b16 %v897, %v894
        %v940 = vpack.c.b16 %v898, %v895
        %v941 = vpack.c.b16 %v899, %v896
        %v942 = vpack.c.b16 %v903, %v900
        %v943 = vpack.c.b16 %v904, %v901
        %v944 = vpack.c.b16 %v905, %v902
        %v945 = vpack.c.b16 %v909, %v906
        %v946 = vpack.c.b16 %v910, %v907
        %v947 = vpack.c.b16 %v911, %v908
        %v948 = vpack.c.b16 %v915, %v912
        %v949 = vpack.c.b16 %v916, %v913
        %v950 = vpack.c.b16 %v917, %v914
        %v951 = vpack.c.b16 %v921, %v918
        %v952 = vpack.c.b16 %v922, %v919
        %v953 = vpack.c.b16 %v923, %v920
        %v954 = vpack.c.b16 %v927, %v924
        %v955 = vpack.c.b16 %v928, %v925
        %v956 = vpack.c.b16 %v929, %v926
        %v957 = vpack.c.b16 %v933, %v930
        %v958 = vpack.c.b16 %v934, %v931
        %v959 = vpack.c.b16 %v935, %v932
        %984 = vmatpush.bf16.msra.mxu0 %v957
        %985 = vmatpush.bf16.msra.mxu0 %v954
        %986 = vmatpush.bf16.msra.mxu0 %v951
        %987 = vmatpush.bf16.msra.mxu0 %v948
        %988 = vmatpush.bf16.msra.mxu0 %v945
        %989 = vmatpush.bf16.msra.mxu0 %v942
        %990 = vmatpush.bf16.msra.mxu0 %v939
        %991 = vmatpush.bf16.msra.mxu0 %v936
        %992 = vmatmul.bf16.gmra.mxu0 %v815
        %v993 = vpop.f32.mrf.mxu0
        %v994 = vadd.f32 %v850, %v993
        %v995 = vpop.f32.mrf.mxu0
        %v996 = vadd.f32 %v850, %v995
        %997 = vdwg.mxu0
        %998 = vmatpush.bf16.msra.mxu0 %v958
        %999 = vmatpush.bf16.msra.mxu0 %v955
        %1000 = vmatpush.bf16.msra.mxu0 %v952
        %1001 = vmatpush.bf16.msra.mxu0 %v949
        %1002 = vmatpush.bf16.msra.mxu0 %v946
        %1003 = vmatpush.bf16.msra.mxu0 %v943
        %1004 = vmatpush.bf16.msra.mxu0 %v940
        %1005 = vmatpush.bf16.msra.mxu0 %v937
        %1006 = vmatmul.bf16.gmra.mxu0 %v815
        %v1007 = vpop.f32.mrf.mxu0
        %v1008 = vadd.f32 %v851, %v1007
        %v1009 = vpop.f32.mrf.mxu0
        %v1010 = vadd.f32 %v851, %v1009
        %1011 = vdwg.mxu0
        %1012 = vmatpush.bf16.msra.mxu0 %v959
        %1013 = vmatpush.bf16.msra.mxu0 %v956
        %1014 = vmatpush.bf16.msra.mxu0 %v953
        %1015 = vmatpush.bf16.msra.mxu0 %v950
        %1016 = vmatpush.bf16.msra.mxu0 %v947
        %1017 = vmatpush.bf16.msra.mxu0 %v944
        %1018 = vmatpush.bf16.msra.mxu0 %v941
        %1019 = vmatpush.bf16.msra.mxu0 %v938
        %1020 = vmatmul.bf16.gmra.mxu0 %v815
        %v1021 = vpop.f32.mrf.mxu0
        %v1022 = vadd.f32 %v852, %v1021
        %v1023 = vpop.f32.mrf.mxu0
        %v1024 = vadd.f32 %v852, %v1023
        %1025 = vdwg.mxu0
        %v1026 = vld [vmem:[%s1] sm:$0x3]
        %v1028 = vrot.slane %v1026, 1
        %v1029 = vpack.c.bf16 %v994, %v994
        %v1030 = vpack.c.bf16 %v996, %v996
        %v1031 = vpack.c.bf16 %v1008, %v1008
        %v1032 = vpack.c.bf16 %v1010, %v1010
        %vm1033 = vcmask 64512
        %v1035 = vsel %vm1033, %v1029, 0
        %v1038 = vsel %vm1033, %v1031, 0
        %1040 = vmatpush.bf16.xpose.msra.mxu0 0
        %1041 = vmatpush.bf16.xpose.msra.mxu0 0
        %1042 = vmatpush.bf16.xpose.msra.mxu0 0
        %1043 = vmatpush.bf16.xpose.msra.mxu0 0
        %1044 = vmatpush.bf16.xpose.msra.mxu0 0
        %1045 = vmatpush.bf16.xpose.msra.mxu0 0
        %1046 = vmatpush.bf16.xpose.msra.mxu0 0
        %1047 = vmatpush.bf16.xpose.msra.mxu0 %v1038
        %1048 = vmatmul.bf16.gmra.mxu0 %v1035
        %v1049 = vpop.f32.mrf.mxu0
        %v1050 = vadd.f32 0.0, %v1049
        %v1051 = vpop.f32.mrf.mxu0
        %1052 = vdwg.mxu0
        %v1054 = vsel %vm1033, %v1030, 0
        %v1057 = vsel %vm1033, %v1032, 0
        %1059 = vmatpush.bf16.xpose.msra.mxu0 0
        %1060 = vmatpush.bf16.xpose.msra.mxu0 0
        %1061 = vmatpush.bf16.xpose.msra.mxu0 0
        %1062 = vmatpush.bf16.xpose.msra.mxu0 0
        %1063 = vmatpush.bf16.xpose.msra.mxu0 0
        %1064 = vmatpush.bf16.xpose.msra.mxu0 0
        %1065 = vmatpush.bf16.xpose.msra.mxu0 0
        %1066 = vmatpush.bf16.xpose.msra.mxu0 %v1057
        %1067 = vmatmul.bf16.gmra.mxu0 %v1054
        %v1068 = vpop.f32.mrf.mxu0
        %v1069 = vadd.f32 0.0, %v1068
        %v1070 = vpop.f32.mrf.mxu0
        %1071 = vdwg.mxu0
        %v1072 = vmul.f32 %v1050, 0.35355338
        %v1073 = vmul.f32 %v1069, 0.35355338
        %v1074 = vperm.slane %v1026, 0
        %v1075 = vperm.slane %v1028, 0
        %v1078 = vadd.f32 %v1072, %v1074
        %v1079 = vadd.f32 %v1073, %v1075
        %v1080 = vsel %vm1033, %v1078, -inf
        %1081 = vmax.xlane.f32.xlu0 %v1080
        %v1082 = vpop.xlane.xlu0 %1081
        %v1083 = vsel %vm1033, %v1079, -inf
        %1084 = vmax.xlane.f32.xlu0 %v1083
        %v1085 = vpop.xlane.xlu0 %1084
        %v1086 = vsub.f32 %v1078, %v1082
        %v1087 = vsub.f32 %v1079, %v1085
        %v1088 = vmul.f32 %v1086, 1.442695
        %v1089 = vpow.pop %v1088
        %v1090 = vmul.f32 %v1087, 1.442695
        %v1091 = vpow.pop %v1090
        %v1092 = vsel %vm1033, %v1089, 0.0
        %1093 = vadd.xlane.f32.xlu0 %v1092
        %v1094 = vpop.xlane.xlu0 %1093
        %v1095 = vsel %vm1033, %v1091, 0.0
        %1096 = vadd.xlane.f32.xlu0 %v1095
        %v1097 = vpop.xlane.xlu0 %1096
        %v1098 = vrcp.pop %v1094
        %v1099 = vrcp.pop %v1097
        %v1100 = vmul.f32 %v1089, %v1098
        %v1101 = vmul.f32 %v1091, %v1099
        %v1102 = vpack.c.bf16 %v1100, %v1100
        %v1103 = vpack.c.bf16 %v1101, %v1101
        %v1104 = vpack.c.bf16 %v1022, %v1022
        %v1105 = vpack.c.bf16 %v1024, %v1024
        %v1107 = vsel %vm1033, %v1102, 0
        %vm1109 = vcmask 1043456
        %v1111 = vsel %vm1109, %v1104, 0
        %1113 = vmatpush.bf16.msra.mxu0 0
        %1114 = vmatpush.bf16.msra.mxu0 0
        %1115 = vmatpush.bf16.msra.mxu0 0
        %1116 = vmatpush.bf16.msra.mxu0 0
        %1117 = vmatpush.bf16.msra.mxu0 0
        %1118 = vmatpush.bf16.msra.mxu0 0
        %1119 = vmatpush.bf16.msra.mxu0 0
        %1120 = vmatpush.bf16.msra.mxu0 %v1111
        %1121 = vmatmul.bf16.gmra.mxu0 %v1107
        %v1122 = vpop.f32.mrf.mxu0
        %v1123 = vadd.f32 0.0, %v1122
        %v1124 = vpop.f32.mrf.mxu0
        %1125 = vdwg.mxu0
        %v1127 = vsel %vm1033, %v1103, 0
        %v1130 = vsel %vm1109, %v1105, 0
        %1132 = vmatpush.bf16.msra.mxu0 0
        %1133 = vmatpush.bf16.msra.mxu0 0
        %1134 = vmatpush.bf16.msra.mxu0 0
        %1135 = vmatpush.bf16.msra.mxu0 0
        %1136 = vmatpush.bf16.msra.mxu0 0
        %1137 = vmatpush.bf16.msra.mxu0 0
        %1138 = vmatpush.bf16.msra.mxu0 0
        %1139 = vmatpush.bf16.msra.mxu0 %v1130
        %1140 = vmatmul.bf16.gmra.mxu0 %v1127
        %v1141 = vpop.f32.mrf.mxu0
        %v1142 = vadd.f32 0.0, %v1141
        %v1143 = vpop.f32.mrf.mxu0
        %1144 = vdwg.mxu0
        %v1145 = vpack.c.bf16 %v1142, %v1123
        %v1146 = vld [vmem:[%s620] sm:$0xff]
        %v1147 = vpack.c.bf16 %v1146, %v1146
        %v1149 = vunpack.c.l.b16 %v1029
        %v1150 = vpack.c.b16 %v1149, %v1149
        %1151 = vrot.lane.b32.xlu0 %v1150, 120
        %v1152 = vpop.permute.xlu0 %1151
        %v1154 = vunpack.c.l.b16 %v1031
        %v1155 = vpack.c.b16 %v1154, %v1154
        %1156 = vrot.lane.b32.xlu0 %v1155, 120
        %v1157 = vpop.permute.xlu0 %1156
        %v1159 = vsel %vm1033, %v1152, 0
        %v1162 = vsel %vm1033, %v1157, 0
        %1164 = vmatpush.bf16.xpose.msra.mxu0 0
        %1165 = vmatpush.bf16.xpose.msra.mxu0 0
        %1166 = vmatpush.bf16.xpose.msra.mxu0 0
        %1167 = vmatpush.bf16.xpose.msra.mxu0 0
        %1168 = vmatpush.bf16.xpose.msra.mxu0 0
        %1169 = vmatpush.bf16.xpose.msra.mxu0 0
        %1170 = vmatpush.bf16.xpose.msra.mxu0 0
        %1171 = vmatpush.bf16.xpose.msra.mxu0 %v1162
        %1172 = vmatmul.bf16.gmra.mxu0 %v1159
        %v1173 = vpop.f32.mrf.mxu0
        %v1174 = vadd.f32 0.0, %v1173
        %v1175 = vpop.f32.mrf.mxu0
        %1176 = vdwg.mxu0
        %v1178 = vunpack.c.l.b16 %v1030
        %v1179 = vpack.c.b16 %v1178, %v1178
        %1180 = vrot.lane.b32.xlu0 %v1179, 120
        %v1181 = vpop.permute.xlu0 %1180
        %v1183 = vunpack.c.l.b16 %v1032
        %v1184 = vpack.c.b16 %v1183, %v1183
        %1185 = vrot.lane.b32.xlu0 %v1184, 120
        %v1186 = vpop.permute.xlu0 %1185
        %v1188 = vsel %vm1033, %v1181, 0
        %v1191 = vsel %vm1033, %v1186, 0
        %1193 = vmatpush.bf16.xpose.msra.mxu0 0
        %1194 = vmatpush.bf16.xpose.msra.mxu0 0
        %1195 = vmatpush.bf16.xpose.msra.mxu0 0
        %1196 = vmatpush.bf16.xpose.msra.mxu0 0
        %1197 = vmatpush.bf16.xpose.msra.mxu0 0
        %1198 = vmatpush.bf16.xpose.msra.mxu0 0
        %1199 = vmatpush.bf16.xpose.msra.mxu0 0
        %1200 = vmatpush.bf16.xpose.msra.mxu0 %v1191
        %1201 = vmatmul.bf16.gmra.mxu0 %v1188
        %v1202 = vpop.f32.mrf.mxu0
        %v1203 = vadd.f32 0.0, %v1202
        %v1204 = vpop.f32.mrf.mxu0
        %1205 = vdwg.mxu0
        %v1206 = vmul.f32 %v1174, 0.35355338
        %v1207 = vmul.f32 %v1203, 0.35355338
        %v1208 = vadd.f32 %v1206, %v1074
        %v1209 = vadd.f32 %v1207, %v1075
        %v1210 = vsel %vm1033, %v1208, -inf
        %1211 = vmax.xlane.f32.xlu0 %v1210
        %v1212 = vpop.xlane.xlu0 %1211
        %v1213 = vsel %vm1033, %v1209, -inf
        %1214 = vmax.xlane.f32.xlu0 %v1213
        %v1215 = vpop.xlane.xlu0 %1214
        %v1216 = vsub.f32 %v1208, %v1212
        %v1217 = vsub.f32 %v1209, %v1215
        %v1218 = vmul.f32 %v1216, 1.442695
        %v1219 = vpow.pop %v1218
        %v1220 = vmul.f32 %v1217, 1.442695
        %v1221 = vpow.pop %v1220
        %v1222 = vsel %vm1033, %v1219, 0.0
        %1223 = vadd.xlane.f32.xlu0 %v1222
        %v1224 = vpop.xlane.xlu0 %1223
        %v1225 = vsel %vm1033, %v1221, 0.0
        %1226 = vadd.xlane.f32.xlu0 %v1225
        %v1227 = vpop.xlane.xlu0 %1226
        %v1228 = vrcp.pop %v1224
        %v1229 = vrcp.pop %v1227
        %v1230 = vmul.f32 %v1219, %v1228
        %v1231 = vmul.f32 %v1221, %v1229
        %v1232 = vpack.c.bf16 %v1230, %v1230
        %v1233 = vpack.c.bf16 %v1231, %v1231
        %v1235 = vunpack.c.l.b16 %v1104
        %v1236 = vpack.c.b16 %v1235, %v1235
        %1237 = vrot.lane.b32.xlu0 %v1236, 120
        %v1238 = vpop.permute.xlu0 %1237
        %v1240 = vsel %vm1033, %v1232, 0
        %v1243 = vsel %vm1109, %v1238, 0
        %1245 = vmatpush.bf16.msra.mxu0 0
        %1246 = vmatpush.bf16.msra.mxu0 0
        %1247 = vmatpush.bf16.msra.mxu0 0
        %1248 = vmatpush.bf16.msra.mxu0 0
        %1249 = vmatpush.bf16.msra.mxu0 0
        %1250 = vmatpush.bf16.msra.mxu0 0
        %1251 = vmatpush.bf16.msra.mxu0 0
        %1252 = vmatpush.bf16.msra.mxu0 %v1243
        %1253 = vmatmul.bf16.gmra.mxu0 %v1240
        %v1254 = vpop.f32.mrf.mxu0
        %v1255 = vadd.f32 0.0, %v1254
        %v1256 = vpop.f32.mrf.mxu0
        %1257 = vdwg.mxu0
        %v1259 = vunpack.c.l.b16 %v1105
        %v1260 = vpack.c.b16 %v1259, %v1259
        %1261 = vrot.lane.b32.xlu0 %v1260, 120
        %v1262 = vpop.permute.xlu0 %1261
        %v1264 = vsel %vm1033, %v1233, 0
        %v1267 = vsel %vm1109, %v1262, 0
        %1269 = vmatpush.bf16.msra.mxu0 0
        %1270 = vmatpush.bf16.msra.mxu0 0
        %1271 = vmatpush.bf16.msra.mxu0 0
        %1272 = vmatpush.bf16.msra.mxu0 0
        %1273 = vmatpush.bf16.msra.mxu0 0
        %1274 = vmatpush.bf16.msra.mxu0 0
        %1275 = vmatpush.bf16.msra.mxu0 0
        %1276 = vmatpush.bf16.msra.mxu0 %v1267
        %1277 = vmatmul.bf16.gmra.mxu0 %v1264
        %v1278 = vpop.f32.mrf.mxu0
        %v1279 = vadd.f32 0.0, %v1278
        %v1280 = vpop.f32.mrf.mxu0
        %1281 = vdwg.mxu0
        %v1282 = vpack.c.bf16 %v1279, %v1255
        %v1283 = vld [vmem:[%s620 + $0x8] sm:$0xff]
        %v1284 = vpack.c.bf16 %v1283, %v1283
        %v1286 = vsel %vm1033, %v1282, 0
        %v1289 = vsel %vm1109, %v1284, 0
        %1291 = vmatpush.bf16.msra.mxu0 0
        %1292 = vmatpush.bf16.msra.mxu0 0
        %1293 = vmatpush.bf16.msra.mxu0 0
        %1294 = vmatpush.bf16.msra.mxu0 0
        %1295 = vmatpush.bf16.msra.mxu0 0
        %1296 = vmatpush.bf16.msra.mxu0 0
        %1297 = vmatpush.bf16.msra.mxu0 0
        %1298 = vmatpush.bf16.msra.mxu0 %v1289
        %1299 = vmatmul.bf16.gmra.mxu0 %v1286
        %v1300 = vpop.f32.mrf.mxu0
        %v1301 = vadd.f32 0.0, %v1300
        %v1302 = vpop.f32.mrf.mxu0
        %v1303 = vadd.f32 0.0, %v1302
        %1304 = vdwg.mxu0
        %v1306 = vsel %vm1033, %v1145, 0
        %v1309 = vsel %vm1109, %v1147, 0
        %1311 = vmatpush.bf16.msra.mxu0 0
        %1312 = vmatpush.bf16.msra.mxu0 0
        %1313 = vmatpush.bf16.msra.mxu0 0
        %1314 = vmatpush.bf16.msra.mxu0 0
        %1315 = vmatpush.bf16.msra.mxu0 0
        %1316 = vmatpush.bf16.msra.mxu0 0
        %1317 = vmatpush.bf16.msra.mxu0 0
        %1318 = vmatpush.bf16.msra.mxu0 %v1309
        %1319 = vmatmul.bf16.gmra.mxu0 %v1306
        %v1320 = vpop.f32.mrf.mxu0
        %v1321 = vadd.f32 %v1301, %v1320
        %v1322 = vpop.f32.mrf.mxu0
        %v1323 = vadd.f32 %v1303, %v1322
        %1324 = vdwg.mxu0
        %1325 = vrot.lane.b32.xlu0 %v1150, 112
        %v1326 = vpop.permute.xlu0 %1325
        %1327 = vrot.lane.b32.xlu0 %v1155, 112
        %v1328 = vpop.permute.xlu0 %1327
        %v1330 = vsel %vm1033, %v1326, 0
        %v1333 = vsel %vm1033, %v1328, 0
        %1335 = vmatpush.bf16.xpose.msra.mxu0 0
        %1336 = vmatpush.bf16.xpose.msra.mxu0 0
        %1337 = vmatpush.bf16.xpose.msra.mxu0 0
        %1338 = vmatpush.bf16.xpose.msra.mxu0 0
        %1339 = vmatpush.bf16.xpose.msra.mxu0 0
        %1340 = vmatpush.bf16.xpose.msra.mxu0 0
        %1341 = vmatpush.bf16.xpose.msra.mxu0 0
        %1342 = vmatpush.bf16.xpose.msra.mxu0 %v1333
        %1343 = vmatmul.bf16.gmra.mxu0 %v1330
        %v1344 = vpop.f32.mrf.mxu0
        %v1345 = vadd.f32 0.0, %v1344
        %v1346 = vpop.f32.mrf.mxu0
        %1347 = vdwg.mxu0
        %1348 = vrot.lane.b32.xlu0 %v1179, 112
        %v1349 = vpop.permute.xlu0 %1348
        %1350 = vrot.lane.b32.xlu0 %v1184, 112
        %v1351 = vpop.permute.xlu0 %1350
        %v1353 = vsel %vm1033, %v1349, 0
        %v1356 = vsel %vm1033, %v1351, 0
        %1358 = vmatpush.bf16.xpose.msra.mxu0 0
        %1359 = vmatpush.bf16.xpose.msra.mxu0 0
        %1360 = vmatpush.bf16.xpose.msra.mxu0 0
        %1361 = vmatpush.bf16.xpose.msra.mxu0 0
        %1362 = vmatpush.bf16.xpose.msra.mxu0 0
        %1363 = vmatpush.bf16.xpose.msra.mxu0 0
        %1364 = vmatpush.bf16.xpose.msra.mxu0 0
        %1365 = vmatpush.bf16.xpose.msra.mxu0 %v1356
        %1366 = vmatmul.bf16.gmra.mxu0 %v1353
        %v1367 = vpop.f32.mrf.mxu0
        %v1368 = vadd.f32 0.0, %v1367
        %v1369 = vpop.f32.mrf.mxu0
        %1370 = vdwg.mxu0
        %v1371 = vmul.f32 %v1345, 0.35355338
        %v1372 = vmul.f32 %v1368, 0.35355338
        %v1373 = vadd.f32 %v1371, %v1074
        %v1374 = vadd.f32 %v1372, %v1075
        %v1375 = vsel %vm1033, %v1373, -inf
        %1376 = vmax.xlane.f32.xlu0 %v1375
        %v1377 = vpop.xlane.xlu0 %1376
        %v1378 = vsel %vm1033, %v1374, -inf
        %1379 = vmax.xlane.f32.xlu0 %v1378
        %v1380 = vpop.xlane.xlu0 %1379
        %v1381 = vsub.f32 %v1373, %v1377
        %v1382 = vsub.f32 %v1374, %v1380
        %v1383 = vmul.f32 %v1381, 1.442695
        %v1384 = vpow.pop %v1383
        %v1385 = vmul.f32 %v1382, 1.442695
        %v1386 = vpow.pop %v1385
        %v1387 = vsel %vm1033, %v1384, 0.0
        %1388 = vadd.xlane.f32.xlu0 %v1387
        %v1389 = vpop.xlane.xlu0 %1388
        %v1390 = vsel %vm1033, %v1386, 0.0
        %1391 = vadd.xlane.f32.xlu0 %v1390
        %v1392 = vpop.xlane.xlu0 %1391
        %v1393 = vrcp.pop %v1389
        %v1394 = vrcp.pop %v1392
        %v1395 = vmul.f32 %v1384, %v1393
        %v1396 = vmul.f32 %v1386, %v1394
        %v1397 = vpack.c.bf16 %v1395, %v1395
        %v1398 = vpack.c.bf16 %v1396, %v1396
        %1399 = vrot.lane.b32.xlu0 %v1236, 112
        %v1400 = vpop.permute.xlu0 %1399
        %v1402 = vsel %vm1033, %v1397, 0
        %v1405 = vsel %vm1109, %v1400, 0
        %1407 = vmatpush.bf16.msra.mxu0 0
        %1408 = vmatpush.bf16.msra.mxu0 0
        %1409 = vmatpush.bf16.msra.mxu0 0
        %1410 = vmatpush.bf16.msra.mxu0 0
        %1411 = vmatpush.bf16.msra.mxu0 0
        %1412 = vmatpush.bf16.msra.mxu0 0
        %1413 = vmatpush.bf16.msra.mxu0 0
        %1414 = vmatpush.bf16.msra.mxu0 %v1405
        %1415 = vmatmul.bf16.gmra.mxu0 %v1402
        %v1416 = vpop.f32.mrf.mxu0
        %v1417 = vadd.f32 0.0, %v1416
        %v1418 = vpop.f32.mrf.mxu0
        %1419 = vdwg.mxu0
        %1420 = vrot.lane.b32.xlu0 %v1260, 112
        %v1421 = vpop.permute.xlu0 %1420
        %v1423 = vsel %vm1033, %v1398, 0
        %v1426 = vsel %vm1109, %v1421, 0
        %1428 = vmatpush.bf16.msra.mxu0 0
        %1429 = vmatpush.bf16.msra.mxu0 0
        %1430 = vmatpush.bf16.msra.mxu0 0
        %1431 = vmatpush.bf16.msra.mxu0 0
        %1432 = vmatpush.bf16.msra.mxu0 0
        %1433 = vmatpush.bf16.msra.mxu0 0
        %1434 = vmatpush.bf16.msra.mxu0 0
        %1435 = vmatpush.bf16.msra.mxu0 %v1426
        %1436 = vmatmul.bf16.gmra.mxu0 %v1423
        %v1437 = vpop.f32.mrf.mxu0
        %v1438 = vadd.f32 0.0, %v1437
        %v1439 = vpop.f32.mrf.mxu0
        %1440 = vdwg.mxu0
        %v1441 = vpack.c.bf16 %v1438, %v1417
        %v1442 = vld [vmem:[%s620 + $0x10] sm:$0xff]
        %v1443 = vpack.c.bf16 %v1442, %v1442
        %v1445 = vsel %vm1033, %v1441, 0
        %v1448 = vsel %vm1109, %v1443, 0
        %1450 = vmatpush.bf16.msra.mxu0 0
        %1451 = vmatpush.bf16.msra.mxu0 0
        %1452 = vmatpush.bf16.msra.mxu0 0
        %1453 = vmatpush.bf16.msra.mxu0 0
        %1454 = vmatpush.bf16.msra.mxu0 0
        %1455 = vmatpush.bf16.msra.mxu0 0
        %1456 = vmatpush.bf16.msra.mxu0 0
        %1457 = vmatpush.bf16.msra.mxu0 %v1448
        %1458 = vmatmul.bf16.gmra.mxu0 %v1445
        %v1459 = vpop.f32.mrf.mxu0
        %v1460 = vadd.f32 0.0, %v1459
        %v1461 = vpop.f32.mrf.mxu0
        %v1462 = vadd.f32 0.0, %v1461
        %1463 = vdwg.mxu0
        %v1464 = vadd.f32 %v1321, %v1460
        %v1465 = vadd.f32 %v1323, %v1462
        %1466 = vrot.lane.b32.xlu0 %v1150, 104
        %v1467 = vpop.permute.xlu0 %1466
        %1468 = vrot.lane.b32.xlu0 %v1155, 104
        %v1469 = vpop.permute.xlu0 %1468
        %v1471 = vsel %vm1033, %v1467, 0
        %v1474 = vsel %vm1033, %v1469, 0
        %1476 = vmatpush.bf16.xpose.msra.mxu0 0
        %1477 = vmatpush.bf16.xpose.msra.mxu0 0
        %1478 = vmatpush.bf16.xpose.msra.mxu0 0
        %1479 = vmatpush.bf16.xpose.msra.mxu0 0
        %1480 = vmatpush.bf16.xpose.msra.mxu0 0
        %1481 = vmatpush.bf16.xpose.msra.mxu0 0
        %1482 = vmatpush.bf16.xpose.msra.mxu0 0
        %1483 = vmatpush.bf16.xpose.msra.mxu0 %v1474
        %1484 = vmatmul.bf16.gmra.mxu0 %v1471
        %v1485 = vpop.f32.mrf.mxu0
        %v1486 = vadd.f32 0.0, %v1485
        %v1487 = vpop.f32.mrf.mxu0
        %1488 = vdwg.mxu0
        %1489 = vrot.lane.b32.xlu0 %v1179, 104
        %v1490 = vpop.permute.xlu0 %1489
        %1491 = vrot.lane.b32.xlu0 %v1184, 104
        %v1492 = vpop.permute.xlu0 %1491
        %v1494 = vsel %vm1033, %v1490, 0
        %v1497 = vsel %vm1033, %v1492, 0
        %1499 = vmatpush.bf16.xpose.msra.mxu0 0
        %1500 = vmatpush.bf16.xpose.msra.mxu0 0
        %1501 = vmatpush.bf16.xpose.msra.mxu0 0
        %1502 = vmatpush.bf16.xpose.msra.mxu0 0
        %1503 = vmatpush.bf16.xpose.msra.mxu0 0
        %1504 = vmatpush.bf16.xpose.msra.mxu0 0
        %1505 = vmatpush.bf16.xpose.msra.mxu0 0
        %1506 = vmatpush.bf16.xpose.msra.mxu0 %v1497
        %1507 = vmatmul.bf16.gmra.mxu0 %v1494
        %v1508 = vpop.f32.mrf.mxu0
        %v1509 = vadd.f32 0.0, %v1508
        %v1510 = vpop.f32.mrf.mxu0
        %1511 = vdwg.mxu0
        %v1512 = vmul.f32 %v1486, 0.35355338
        %v1513 = vmul.f32 %v1509, 0.35355338
        %v1514 = vadd.f32 %v1512, %v1074
        %v1515 = vadd.f32 %v1513, %v1075
        %v1516 = vsel %vm1033, %v1514, -inf
        %1517 = vmax.xlane.f32.xlu0 %v1516
        %v1518 = vpop.xlane.xlu0 %1517
        %v1519 = vsel %vm1033, %v1515, -inf
        %1520 = vmax.xlane.f32.xlu0 %v1519
        %v1521 = vpop.xlane.xlu0 %1520
        %v1522 = vsub.f32 %v1514, %v1518
        %v1523 = vsub.f32 %v1515, %v1521
        %v1524 = vmul.f32 %v1522, 1.442695
        %v1525 = vpow.pop %v1524
        %v1526 = vmul.f32 %v1523, 1.442695
        %v1527 = vpow.pop %v1526
        %v1528 = vsel %vm1033, %v1525, 0.0
        %1529 = vadd.xlane.f32.xlu0 %v1528
        %v1530 = vpop.xlane.xlu0 %1529
        %v1531 = vsel %vm1033, %v1527, 0.0
        %1532 = vadd.xlane.f32.xlu0 %v1531
        %v1533 = vpop.xlane.xlu0 %1532
        %v1534 = vrcp.pop %v1530
        %v1535 = vrcp.pop %v1533
        %v1536 = vmul.f32 %v1525, %v1534
        %v1537 = vmul.f32 %v1527, %v1535
        %v1538 = vpack.c.bf16 %v1536, %v1536
        %v1539 = vpack.c.bf16 %v1537, %v1537
        %1540 = vrot.lane.b32.xlu0 %v1236, 104
        %v1541 = vpop.permute.xlu0 %1540
        %v1543 = vsel %vm1033, %v1538, 0
        %v1546 = vsel %vm1109, %v1541, 0
        %1548 = vmatpush.bf16.msra.mxu0 0
        %1549 = vmatpush.bf16.msra.mxu0 0
        %1550 = vmatpush.bf16.msra.mxu0 0
        %1551 = vmatpush.bf16.msra.mxu0 0
        %1552 = vmatpush.bf16.msra.mxu0 0
        %1553 = vmatpush.bf16.msra.mxu0 0
        %1554 = vmatpush.bf16.msra.mxu0 0
        %1555 = vmatpush.bf16.msra.mxu0 %v1546
        %1556 = vmatmul.bf16.gmra.mxu0 %v1543
        %v1557 = vpop.f32.mrf.mxu0
        %v1558 = vadd.f32 0.0, %v1557
        %v1559 = vpop.f32.mrf.mxu0
        %1560 = vdwg.mxu0
        %1561 = vrot.lane.b32.xlu0 %v1260, 104
        %v1562 = vpop.permute.xlu0 %1561
        %v1564 = vsel %vm1033, %v1539, 0
        %v1567 = vsel %vm1109, %v1562, 0
        %1569 = vmatpush.bf16.msra.mxu0 0
        %1570 = vmatpush.bf16.msra.mxu0 0
        %1571 = vmatpush.bf16.msra.mxu0 0
        %1572 = vmatpush.bf16.msra.mxu0 0
        %1573 = vmatpush.bf16.msra.mxu0 0
        %1574 = vmatpush.bf16.msra.mxu0 0
        %1575 = vmatpush.bf16.msra.mxu0 0
        %1576 = vmatpush.bf16.msra.mxu0 %v1567
        %1577 = vmatmul.bf16.gmra.mxu0 %v1564
        %v1578 = vpop.f32.mrf.mxu0
        %v1579 = vadd.f32 0.0, %v1578
        %v1580 = vpop.f32.mrf.mxu0
        %1581 = vdwg.mxu0
        %v1582 = vpack.c.bf16 %v1579, %v1558
        %v1583 = vld [vmem:[%s620 + $0x18] sm:$0xff]
        %v1584 = vpack.c.bf16 %v1583, %v1583
        %v1586 = vsel %vm1033, %v1582, 0
        %v1589 = vsel %vm1109, %v1584, 0
        %1591 = vmatpush.bf16.msra.mxu0 0
        %1592 = vmatpush.bf16.msra.mxu0 0
        %1593 = vmatpush.bf16.msra.mxu0 0
        %1594 = vmatpush.bf16.msra.mxu0 0
        %1595 = vmatpush.bf16.msra.mxu0 0
        %1596 = vmatpush.bf16.msra.mxu0 0
        %1597 = vmatpush.bf16.msra.mxu0 0
        %1598 = vmatpush.bf16.msra.mxu0 %v1589
        %1599 = vmatmul.bf16.gmra.mxu0 %v1586
        %v1600 = vpop.f32.mrf.mxu0
        %v1601 = vadd.f32 0.0, %v1600
        %v1602 = vpop.f32.mrf.mxu0
        %v1603 = vadd.f32 0.0, %v1602
        %1604 = vdwg.mxu0
        %v1605 = vadd.f32 %v1464, %v1601
        %v1606 = vadd.f32 %v1465, %v1603
        %v1607 = vld [vmem:[%s721] sm:$0x1]
        %v1609 = vperm.slane %v1607, 0
        %v1611 = vadd.f32 %v1605, %v1609
        %v1612 = vadd.f32 %v1606, %v1609
        %v1613 = vadd.f32 %v813, %v1611
        %v1614 = vadd.f32 %v814, %v1612
        %v1615 = vld [vmem:[%s724] sm:$0x1]
        %v1616 = vld [vmem:[%s727] sm:$0x1]
        %1617 = vadd.xlane.f32.xlu0 %v1613
        %v1618 = vpop.xlane.xlu0 %1617
        %1619 = vadd.xlane.f32.xlu0 %v1614
        %v1620 = vpop.xlane.xlu0 %1619
        %v1621 = vmul.f32 %v1618, 0.03125
        %v1622 = vmul.f32 %v1620, 0.03125
        %v1623 = vsub.f32 %v1613, %v1621
        %v1624 = vsub.f32 %v1614, %v1622
        %v1625 = vmul.f32 %v1623, %v750
        %v1626 = vmul.f32 %v1624, %v750
        %v1627 = vmul.f32 %v1625, %v1625
        %v1628 = vmul.f32 %v1626, %v1626
        %1629 = vadd.xlane.f32.xlu0 %v1627
        %v1630 = vpop.xlane.xlu0 %1629
        %1631 = vadd.xlane.f32.xlu0 %v1628
        %v1632 = vpop.xlane.xlu0 %1631
        %v1633 = vmul.f32 %v1630, 0.03125
        %v1634 = vmul.f32 %v1632, 0.03125
        %v1635 = vadd.f32 %v1633, 1e-12
        %v1636 = vadd.f32 %v1634, 1e-12
        %v1637 = vrsqrt.pop %v1635
        %v1638 = vmul.f32 %v1637, %v1635
        %v1639 = vmul.f32 %v1638, %v1637
        %v1640 = vmul.f32 0.5, %v1639
        %v1641 = vsub.f32 1.5, %v1640
        %v1642 = vmul.f32 %v1637, %v1641
        %vm1643 = vweird.f32 %v1635
        %vm1644 = vweird.f32 %v1637
        %vm1645 = vmor %vm1643, %vm1644
        %v1646 = vsel %vm1645, %v1637, %v1642
        %v1647 = vrsqrt.pop %v1636
        %v1648 = vmul.f32 %v1647, %v1636
        %v1649 = vmul.f32 %v1648, %v1647
        %v1650 = vmul.f32 0.5, %v1649
        %v1651 = vsub.f32 1.5, %v1650
        %v1652 = vmul.f32 %v1647, %v1651
        %vm1653 = vweird.f32 %v1636
        %vm1654 = vweird.f32 %v1647
        %vm1655 = vmor %vm1653, %vm1654
        %v1656 = vsel %vm1655, %v1647, %v1652
        %v1657 = vmul.f32 %v1625, %v1646
        %v1658 = vmul.f32 %v1626, %v1656
        %v1660 = vperm.slane %v1615, 0
        %v1662 = vmul.f32 %v1657, %v1660
        %v1663 = vmul.f32 %v1658, %v1660
        %v1665 = vperm.slane %v1616, 0
        %v1667 = vadd.f32 %v1662, %v1665
        %v1668 = vadd.f32 %v1663, %v1665
        %v1669 = vpack.c.bf16 %v1668, %v1667
        %v1670 = vld [vmem:[%s732] sm:$0xf]
        %v1671 = vld [vmem:[%s732 + $0x4] sm:$0xf]
        %v1672 = vld [vmem:[%s732 + $0x8] sm:$0xf]
        %v1673 = vld [vmem:[%s732 + $0xc] sm:$0xf]
        %v1674 = vld [vmem:[%s732 + $0x10] sm:$0xf]
        %v1675 = vld [vmem:[%s732 + $0x14] sm:$0xf]
        %v1676 = vld [vmem:[%s732 + $0x18] sm:$0xf]
        %v1677 = vld [vmem:[%s732 + $0x1c] sm:$0xf]
        %v1678 = vld [vmem:[%s732 + $0x20] sm:$0xf]
        %v1679 = vld [vmem:[%s732 + $0x24] sm:$0xf]
        %v1680 = vld [vmem:[%s732 + $0x28] sm:$0xf]
        %v1681 = vld [vmem:[%s732 + $0x2c] sm:$0xf]
        %v1682 = vld [vmem:[%s732 + $0x30] sm:$0xf]
        %v1683 = vld [vmem:[%s732 + $0x34] sm:$0xf]
        %v1684 = vld [vmem:[%s732 + $0x38] sm:$0xf]
        %v1685 = vld [vmem:[%s732 + $0x3c] sm:$0xf]
        %v1686 = vld [vmem:[%s735] sm:$0x1]
        %v1688 = vperm.slane %v1686, 0
        %v1706 = vunpack.c.l.b16 %v1670
        %v1707 = vunpack.c.l.b16 %v1671
        %v1708 = vunpack.c.l.b16 %v1672
        %v1709 = vunpack.c.l.b16 %v1673
        %v1710 = vunpack.c.l.b16 %v1674
        %v1711 = vunpack.c.l.b16 %v1675
        %v1712 = vunpack.c.l.b16 %v1676
        %v1713 = vunpack.c.l.b16 %v1677
        %v1714 = vunpack.c.l.b16 %v1678
        %v1715 = vunpack.c.l.b16 %v1679
        %v1716 = vunpack.c.l.b16 %v1680
        %v1717 = vunpack.c.l.b16 %v1681
        %v1718 = vunpack.c.l.b16 %v1682
        %v1719 = vunpack.c.l.b16 %v1683
        %v1720 = vunpack.c.l.b16 %v1684
        %v1721 = vunpack.c.l.b16 %v1685
        %v1722 = vpack.c.b16 %v1707, %v1706
        %v1723 = vpack.c.b16 %v1709, %v1708
        %v1724 = vpack.c.b16 %v1711, %v1710
        %v1725 = vpack.c.b16 %v1713, %v1712
        %v1726 = vpack.c.b16 %v1715, %v1714
        %v1727 = vpack.c.b16 %v1717, %v1716
        %v1728 = vpack.c.b16 %v1719, %v1718
        %v1729 = vpack.c.b16 %v1721, %v1720
        %1738 = vmatpush.bf16.msra.mxu0 %v1729
        %1739 = vmatpush.bf16.msra.mxu0 %v1728
        %1740 = vmatpush.bf16.msra.mxu0 %v1727
        %1741 = vmatpush.bf16.msra.mxu0 %v1726
        %1742 = vmatpush.bf16.msra.mxu0 %v1725
        %1743 = vmatpush.bf16.msra.mxu0 %v1724
        %1744 = vmatpush.bf16.msra.mxu0 %v1723
        %1745 = vmatpush.bf16.msra.mxu0 %v1722
        %1746 = vmatmul.bf16.gmra.mxu0 %v1669
        %v1747 = vpop.f32.mrf.mxu0
        %v1748 = vadd.f32 %v1688, %v1747
        %v1749 = vpop.f32.mrf.mxu0
        %v1750 = vadd.f32 %v1688, %v1749
        %1751 = vdwg.mxu0
        %v1752 = vmul.f32 %v1748, %v1748
        %v1753 = vmul.f32 %v1750, %v1750
        %v1754 = vmul.f32 %v1748, %v1752
        %v1755 = vmul.f32 %v1750, %v1753
        %v1756 = vmul.f32 %v1754, 0.044715
        %v1757 = vmul.f32 %v1755, 0.044715
        %v1758 = vadd.f32 %v1748, %v1756
        %v1759 = vadd.f32 %v1750, %v1757
        %v1760 = vmul.f32 %v1758, 0.7978846
        %v1761 = vmul.f32 %v1759, 0.7978846
        %v1762 = vtanh.pop %v1760
        %v1763 = vtanh.pop %v1761
        %v1764 = vadd.f32 %v1762, 1.0
        %v1765 = vadd.f32 %v1763, 1.0
        %v1766 = vmul.f32 %v1764, 0.5
        %v1767 = vmul.f32 %v1765, 0.5
        %v1768 = vmul.f32 %v1748, %v1766
        %v1769 = vmul.f32 %v1750, %v1767
        %v1770 = vpack.c.bf16 %v1769, %v1768
        %v1771 = vld [vmem:[%s630] sm:$0xf]
        %v1772 = vld [vmem:[%s630 + $0x4] sm:$0xf]
        %v1773 = vld [vmem:[%s630 + $0x8] sm:$0xf]
        %v1774 = vld [vmem:[%s630 + $0xc] sm:$0xf]
        %v1775 = vld [vmem:[%s630 + $0x10] sm:$0xf]
        %v1776 = vld [vmem:[%s630 + $0x14] sm:$0xf]
        %v1777 = vld [vmem:[%s630 + $0x18] sm:$0xf]
        %v1778 = vld [vmem:[%s630 + $0x1c] sm:$0xf]
        %v1779 = vld [vmem:[%s630 + $0x20] sm:$0xf]
        %v1780 = vld [vmem:[%s630 + $0x24] sm:$0xf]
        %v1781 = vld [vmem:[%s630 + $0x28] sm:$0xf]
        %v1782 = vld [vmem:[%s630 + $0x2c] sm:$0xf]
        %v1783 = vld [vmem:[%s630 + $0x30] sm:$0xf]
        %v1784 = vld [vmem:[%s630 + $0x34] sm:$0xf]
        %v1785 = vld [vmem:[%s630 + $0x38] sm:$0xf]
        %v1786 = vld [vmem:[%s630 + $0x3c] sm:$0xf]
        %v1787 = vld [vmem:[%s738] sm:$0x1]
        %v1789 = vperm.slane %v1787, 0
        %v1807 = vunpack.c.l.b16 %v1771
        %v1808 = vunpack.c.l.b16 %v1772
        %v1809 = vunpack.c.l.b16 %v1773
        %v1810 = vunpack.c.l.b16 %v1774
        %v1811 = vunpack.c.l.b16 %v1775
        %v1812 = vunpack.c.l.b16 %v1776
        %v1813 = vunpack.c.l.b16 %v1777
        %v1814 = vunpack.c.l.b16 %v1778
        %v1815 = vunpack.c.l.b16 %v1779
        %v1816 = vunpack.c.l.b16 %v1780
        %v1817 = vunpack.c.l.b16 %v1781
        %v1818 = vunpack.c.l.b16 %v1782
        %v1819 = vunpack.c.l.b16 %v1783
        %v1820 = vunpack.c.l.b16 %v1784
        %v1821 = vunpack.c.l.b16 %v1785
        %v1822 = vunpack.c.l.b16 %v1786
        %v1823 = vpack.c.b16 %v1808, %v1807
        %v1824 = vpack.c.b16 %v1810, %v1809
        %v1825 = vpack.c.b16 %v1812, %v1811
        %v1826 = vpack.c.b16 %v1814, %v1813
        %v1827 = vpack.c.b16 %v1816, %v1815
        %v1828 = vpack.c.b16 %v1818, %v1817
        %v1829 = vpack.c.b16 %v1820, %v1819
        %v1830 = vpack.c.b16 %v1822, %v1821
        %1839 = vmatpush.bf16.msra.mxu0 %v1830
        %1840 = vmatpush.bf16.msra.mxu0 %v1829
        %1841 = vmatpush.bf16.msra.mxu0 %v1828
        %1842 = vmatpush.bf16.msra.mxu0 %v1827
        %1843 = vmatpush.bf16.msra.mxu0 %v1826
        %1844 = vmatpush.bf16.msra.mxu0 %v1825
        %1845 = vmatpush.bf16.msra.mxu0 %v1824
        %1846 = vmatpush.bf16.msra.mxu0 %v1823
        %1847 = vmatmul.bf16.gmra.mxu0 %v1770
        %v1848 = vpop.f32.mrf.mxu0
        %v1849 = vadd.f32 %v1789, %v1848
        %v1850 = vpop.f32.mrf.mxu0
        %v1851 = vadd.f32 %v1789, %v1850
        %1852 = vdwg.mxu0
        %v1853 = vadd.f32 %v1667, %v1849
        %v1854 = vadd.f32 %v1668, %v1851
        %v1855 = vld [vmem:[%s741] sm:$0x1]
        %v1856 = vld [vmem:[%s744] sm:$0x1]
        %1857 = vadd.xlane.f32.xlu0 %v1853
        %v1858 = vpop.xlane.xlu0 %1857
        %1859 = vadd.xlane.f32.xlu0 %v1854
        %v1860 = vpop.xlane.xlu0 %1859
        %v1861 = vmul.f32 %v1858, 0.03125
        %v1862 = vmul.f32 %v1860, 0.03125
        %v1863 = vsub.f32 %v1853, %v1861
        %v1864 = vsub.f32 %v1854, %v1862
        %v1865 = vmul.f32 %v1863, %v750
        %v1866 = vmul.f32 %v1864, %v750
        %v1867 = vmul.f32 %v1865, %v1865
        %v1868 = vmul.f32 %v1866, %v1866
        %1869 = vadd.xlane.f32.xlu0 %v1867
        %v1870 = vpop.xlane.xlu0 %1869
        %1871 = vadd.xlane.f32.xlu0 %v1868
        %v1872 = vpop.xlane.xlu0 %1871
        %v1873 = vmul.f32 %v1870, 0.03125
        %v1874 = vmul.f32 %v1872, 0.03125
        %v1875 = vadd.f32 %v1873, 1e-12
        %v1876 = vadd.f32 %v1874, 1e-12
        %v1877 = vrsqrt.pop %v1875
        %v1878 = vmul.f32 %v1877, %v1875
        %v1879 = vmul.f32 %v1878, %v1877
        %v1880 = vmul.f32 0.5, %v1879
        %v1881 = vsub.f32 1.5, %v1880
        %v1882 = vmul.f32 %v1877, %v1881
        %vm1883 = vweird.f32 %v1875
        %vm1884 = vweird.f32 %v1877
        %vm1885 = vmor %vm1883, %vm1884
        %v1886 = vsel %vm1885, %v1877, %v1882
        %v1887 = vrsqrt.pop %v1876
        %v1888 = vmul.f32 %v1887, %v1876
        %v1889 = vmul.f32 %v1888, %v1887
        %v1890 = vmul.f32 0.5, %v1889
        %v1891 = vsub.f32 1.5, %v1890
        %v1892 = vmul.f32 %v1887, %v1891
        %vm1893 = vweird.f32 %v1876
        %vm1894 = vweird.f32 %v1887
        %vm1895 = vmor %vm1893, %vm1894
        %v1896 = vsel %vm1895, %v1887, %v1892
        %v1897 = vmul.f32 %v1865, %v1886
        %v1898 = vmul.f32 %v1866, %v1896
        %v1900 = vperm.slane %v1855, 0
        %v1902 = vmul.f32 %v1897, %v1900
        %v1903 = vmul.f32 %v1898, %v1900
        %v1905 = vperm.slane %v1856, 0
        %v1907 = vadd.f32 %v1902, %v1905
        %v1908 = vadd.f32 %v1903, %v1905
        %1909 = vst [vmem:[%s16] sm:$0xff] %v1907
        %1910 = vst [vmem:[%s16 + $0x8] sm:$0xff] %v1908
        // Predicated region
        $region101: #{transformer_forward.1} parent=83 // pred_check
          %p1911 = pneg %p442
        $region102: #{transformer_forward.1} parent=83 // pred_check_branch
          %1913 = sbr.rel (%p1911) target = $region104
        $region103: #{transformer_forward.1} parent=83 // pred_region
          _
        $region104: #{transformer_forward.1} parent=83 // pred_fallthru
          _
        // Predicated region
        $region105: #{transformer_forward.1} parent=83 // pred_check
          %p1914 = pneg %p442
        $region106: #{transformer_forward.1} parent=83 // pred_check_branch
          %1916 = sbr.rel (%p1914) target = $region108
        $region107: #{transformer_forward.1} parent=83 // pred_region
          _
        $region108: #{transformer_forward.1} parent=83 // pred_fallthru
          _
      $region84: #{transformer_forward.1} parent=5 // pred_fallthru
        _
      %p1917 = scmp.le.s32.totalorder 2, %s28
      // Predicated region
      $region109: #{transformer_forward.1} parent=5 // pred_check
        %p1918 = pneg %p1917
      $region110: #{transformer_forward.1} parent=5 // pred_check_branch
        %1920 = sbr.rel (%p1918) target = $region112
      $region111: #{transformer_forward.1} parent=5 // pred_region
        %s1921 = ssub.s32 %s28, 2
      $region112: #{transformer_forward.1} parent=5 // pred_fallthru
        _
    $region6: #{transformer_forward.1} parent=1 // loop_footer
      %s32 = sadd.s32 1, %s28
    $region7: #{transformer_forward.1} parent=1 // loop_footer_branch
      %27 = sbr.rel target = $region3
    $region8: #{transformer_forward.1} parent=1 // loop_exit
      _
    %1922 = vsyncpa [#allocation3], 1
    %s1923 = scalar_lea.sflag [#allocation3], 1
    %1924 = vsyncpa %s1923, 1
    %1925 = vsyncpa [#allocation5], 1
    %s1926 = scalar_lea.sflag [#allocation5], 1
    %1927 = vsyncpa %s1926, 1

</llo_original>
